<compile_context>
chip_gen: v7x
topology: tpu7x:2x2x1
jax: 0.10.0
libtpu: 0.0.40
codegen_flags: <defaults>
</compile_context>

<pallas_src>
import math
import functools

import numpy as np
import jax
import jax.numpy as jnp
from jax.experimental import pallas as pl
from jax.experimental.pallas import tpu as pltpu

DELTA = 0.001  # matches LogGaborConv2d.delta


# ---------------------------------------------------------------------------
# Pallas kernel 1: log-Gabor weight generation, emitted directly in the
# matmul layout (OC, KH*KW*C) where column index = tap * C + c.
#   freq/theta/sigma/psi : (OC, K)   host-tiled from (OC, C)
#   xg/yg                : (1, K)    host-repeated from the (KH*KW,) grid
#   f0/theta0            : (1, 1)
#   w (out)              : (OC, K)   bf16 (internal math in f32)
# ---------------------------------------------------------------------------
def loggabor_weight_kernel(freq_ref, theta_ref, sigma_ref, psi_ref,
                           xg_ref, yg_ref, f0_ref, theta0_ref, w_ref):
    freq = freq_ref[...]
    theta = theta_ref[...]
    sigma = sigma_ref[...]
    psi = psi_ref[...]
    xg = xg_ref[...]
    yg = yg_ref[...]
    f0 = f0_ref[...]
    theta0 = theta0_ref[...]

    cos_t = jnp.cos(theta)
    sin_t = jnp.sin(theta)
    rotx = xg * cos_t + yg * sin_t
    roty = -xg * sin_t + yg * cos_t
    r = jnp.sqrt(rotx * rotx + roty * roty + DELTA)

    log_f0 = jnp.log(f0)
    # divides -> reciprocal (EUP slot) + VPU multiplies
    inv_denom = pl.reciprocal(2.0 * (jnp.log(sigma) - log_f0), approx=False)
    u = (jnp.log(r) - log_f0) * inv_denom
    g_radial = jnp.exp(-(u * u))

    inv_2sig2 = pl.reciprocal(2.0 * sigma * sigma, approx=False)
    dth = theta - theta0
    g_angular = jnp.exp(-(dth * dth) * inv_2sig2)

    g = g_radial * g_angular * jnp.cos(freq * r + psi)
    g = g * (inv_2sig2 * (1.0 / math.pi))          # == g / (2*pi*sigma^2)
    w_ref[...] = g.astype(w_ref.dtype)


def compute_loggabor_weights(params, kh, kw):
    """Returns the filter bank as a bf16 (OC, KH*KW*C) matrix."""
    oc, c = params["freq"].shape
    taps = kh * kw
    K = taps * c

    tile_p = lambda p: jnp.tile(p.astype(jnp.float32), (1, taps))        # [o, t*c+i] = p[o,i]
    rep_g = lambda g: jnp.repeat(g.reshape(-1).astype(jnp.float32), c).reshape(1, K)

    w_mat = pl.pallas_call(
        loggabor_weight_kernel,
        out_shape=jax.ShapeDtypeStruct((oc, K), jnp.bfloat16),
    )(tile_p(params["freq"]), tile_p(params["theta"]),
      tile_p(params["sigma"]), tile_p(params["psi"]),
      rep_g(params["xg"]), rep_g(params["yg"]),
      params["f0"], params["theta0"])
    return w_mat                                                          # (OC, KH*KW*C)


# ---------------------------------------------------------------------------
# Pallas kernel 2: fused im2col + VALID conv as accumulated shifted MXU dots.
#   x_ref : (C, L)       bf16, flattened (H*W + pad) spatial per batch
#   w_ref : (OC, KH*KW*C) bf16
#   o_ref : (OC, TM)     f32, flat output positions m = y*W + xo
# out[o, y*W+xo] = sum_{i,j,c} w[o, (i*kw+j)*C + c] * x[c, (y+i)*W + (xo+j)]
# ---------------------------------------------------------------------------
def fused_conv_kernel(x_ref, w_ref, o_ref, *, kh, kw, w_img, tm, mt):
    c = x_ref.shape[0]
    oc = o_ref.shape[0]
    m0 = 0 if mt == 1 else pl.program_id(1) * tm
    acc = jnp.zeros((oc, tm), jnp.float32)
    for t in range(kh * kw):
        i, j = divmod(t, kw)
        xs = x_ref[:, pl.ds(m0 + i * w_img + j, tm)]     # (C, TM) bf16
        wt = w_ref[:, t * c:(t + 1) * c]                 # (OC, C) bf16
        acc = acc + jnp.dot(wt, xs, preferred_element_type=jnp.float32)
    o_ref[...] = acc


def pallas_conv2d_valid(x_nchw, w_mat, *, kh, kw):
    n, c, h, w = x_nchw.shape
    oc = w_mat.shape[0]
    oh, ow = h - kh + 1, w - kw + 1
    m_flat = oh * w                      # output rows stretched to full width W

    # M tiling (lane axis): small images -> one lane-dense tile per batch,
    # large images -> 512-wide tiles (multiple of 128).
    if m_flat <= 1024:
        tm, mt = m_flat, 1
    else:
        tm = 512
        mt = pl.cdiv(m_flat, tm)

    # Flatten spatial and pad so every shifted (C, TM) window stays in bounds.
    l_needed = mt * tm + (kh - 1) * w + (kw - 1)
    x_flat = x_nchw.reshape(n, c, h * w).astype(jnp.bfloat16)
    if l_needed > h * w:
        x_flat = jnp.pad(x_flat, ((0, 0), (0, 0), (0, l_needed - h * w)))
    L = x_flat.shape[2]

    # Explicit VMEM budget (double-buffered blocks + headroom), capped for v7x.
    bytes_x = c * L * 2
    bytes_w = oc * kh * kw * c * 2
    bytes_o = oc * tm * 4
    vmem_limit = int(min(max(2 * (bytes_x + bytes_w + bytes_o) + (4 << 20),
                             8 << 20), 60 << 20))

    kernel = functools.partial(fused_conv_kernel,
                               kh=kh, kw=kw, w_img=w, tm=tm, mt=mt)

    out_flat = pl.pallas_call(
        kernel,
        out_shape=jax.ShapeDtypeStruct((n, oc, mt * tm), jnp.float32),
        grid_spec=pltpu.PrefetchScalarGridSpec(
            num_scalar_prefetch=0,
            grid=(n, mt),
            in_specs=[
                pl.BlockSpec((None, c, L), lambda b, m: (b, 0, 0)),
                pl.BlockSpec((oc, kh * kw * c), lambda b, m: (0, 0)),
            ],
            out_specs=pl.BlockSpec((None, oc, tm), lambda b, m: (b, 0, m)),
        ),
        compiler_params=pltpu.CompilerParams(
            dimension_semantics=("parallel", "parallel"),
            vmem_limit_bytes=vmem_limit),
    )(x_flat, w_mat)

    # Discard padded positions and the xo >= OW columns of each stride-W row.
    out = out_flat[:, :, :m_flat].reshape(n, oc, oh, w)[:, :, :, :ow]
    return out                                             # (N, OC, OH, OW)


# ---------------------------------------------------------------------------
# Forward pass of FrequencyLogGaborConv2d
# ---------------------------------------------------------------------------
def frequency_log_gabor_conv2d(x, params, *, kh, kw):
    # TODO(synk): 2-D FFT / fftshift / abs / angle have no clean Pallas TPU
    # equivalent -> computed with jnp.fft (plain JAX glue).
    x_freq = jnp.fft.fft2(x)
    x_freq = jnp.fft.fftshift(x_freq)       # all axes == torch.fft.fftshift default
    magnitude = jnp.abs(x_freq)
    phase = jnp.angle(x_freq)
    x_cat = jnp.concatenate([magnitude, phase], axis=1)    # (N, 2C, H, W)

    w_mat = compute_loggabor_weights(params, kh, kw)       # (OC, KH*KW*2C) bf16
    return pallas_conv2d_valid(x_cat, w_mat, kh=kh, kw=kw)


# ---------------------------------------------------------------------------
# Deterministic parameter init (shapes match LogGaborConv2d.__init__)
# ---------------------------------------------------------------------------
def init_params(key, in_channels, out_channels, kernel_size):
    ic2 = in_channels * 2                   # FrequencyLogGaborConv2d doubles channels
    kh = kw = kernel_size
    k1, k2, k3 = jax.random.split(key, 3)

    freq = (math.pi / 2.0) * jnp.power(
        jnp.float32(math.sqrt(2.0)),
        -jax.random.randint(k1, (out_channels, ic2), 0, 5).astype(jnp.float32))
    theta = (math.pi / 8.0) * jax.random.randint(
        k2, (out_channels, ic2), 0, 8).astype(jnp.float32)
    sigma = math.pi / freq
    psi = math.pi * jax.random.uniform(k3, (out_channels, ic2), dtype=jnp.float32)
    f0 = jnp.ones((1, 1), jnp.float32)
    theta0 = jnp.ones((1, 1), jnp.float32)

    x0 = float(math.ceil(kh / 2.0))
    y0 = float(math.ceil(kw / 2.0))
    lin_h = jnp.linspace(-x0 + 1.0, x0, kh)       # -> self.y values (vary over rows)
    lin_w = jnp.linspace(-y0 + 1.0, y0, kw)       # -> self.x values (vary over cols)
    yg, xg = jnp.meshgrid(lin_h, lin_w, indexing="ij")    # both (KH, KW)

    return dict(freq=freq, theta=theta, sigma=sigma, psi=psi,
                f0=f0, theta0=theta0,
                xg=xg.reshape(1, kh * kw).astype(jnp.float32),
                yg=yg.reshape(1, kh * kw).astype(jnp.float32))


# ---------------------------------------------------------------------------
# Pure-JAX reference (for numerical sanity check)
# ---------------------------------------------------------------------------
def reference_forward(x, params, kh, kw):
    x_freq = jnp.fft.fftshift(jnp.fft.fft2(x))
    x_cat = jnp.concatenate([jnp.abs(x_freq), jnp.angle(x_freq)], axis=1)

    oc, ic = params["freq"].shape
    P = oc * ic
    freq = params["freq"].reshape(P, 1)
    theta = params["theta"].reshape(P, 1)
    sigma = params["sigma"].reshape(P, 1)
    psi = params["psi"].reshape(P, 1)
    xg, yg = params["xg"], params["yg"]
    f0, theta0 = params["f0"], params["theta0"]

    rotx = xg * jnp.cos(theta) + yg * jnp.sin(theta)
    roty = -xg * jnp.sin(theta) + yg * jnp.cos(theta)
    r = jnp.sqrt(rotx ** 2 + roty ** 2 + DELTA)
    g_radial = jnp.exp(-(((jnp.log(r) - jnp.log(f0)) / (2 * jnp.log(sigma / f0))) ** 2))
    g_angular = jnp.exp(-((theta - theta0) ** 2) / (2 * sigma ** 2))
    g = g_radial * g_angular * jnp.cos(freq * r + psi) / (2 * math.pi * sigma ** 2)
    w = g.reshape(oc, ic, kh, kw)

    return jax.lax.conv_general_dilated(
        x_cat, w, window_strides=(1, 1), padding="VALID",
        dimension_numbers=("NCHW", "OIHW", "NCHW"))


if __name__ == "__main__":
    in_channels, out_channels, kernel_size = 4, 8, 3
    key = jax.random.PRNGKey(0)
    kp, kx = jax.random.split(key)

    params = init_params(kp, in_channels, out_channels, kernel_size)
    x = jax.random.normal(kx, (2, in_channels, 16, 16), dtype=jnp.float32)

    fwd = jax.jit(functools.partial(frequency_log_gabor_conv2d,
                                    kh=kernel_size, kw=kernel_size))
    out = jax.block_until_ready(fwd(x, params))
    ref = jax.block_until_ready(reference_forward(x, params, kernel_size, kernel_size))

    oh = ow = 16 - kernel_size + 1
    assert out.shape == (2, out_channels, oh, ow), out.shape
    out_np, ref_np = np.asarray(out), np.asarray(ref)
    assert np.isfinite(out_np).all()
    rel_err = np.max(np.abs(out_np - ref_np)) / (np.max(np.abs(ref_np)) + 1e-6)
    assert rel_err < 2e-2, f"relative error too large: {rel_err}"

    print("KERNEL_OK")
</pallas_src>

<mosaic_0001>
module attributes {stable_mosaic.version = 11 : i64} {
  func.func @loggabor_weight_kernel(%arg0: memref<8x72xf32, #tpu.memory_space<vmem>>, %arg1: memref<8x72xf32, #tpu.memory_space<vmem>>, %arg2: memref<8x72xf32, #tpu.memory_space<vmem>>, %arg3: memref<8x72xf32, #tpu.memory_space<vmem>>, %arg4: memref<1x72xf32, #tpu.memory_space<vmem>>, %arg5: memref<1x72xf32, #tpu.memory_space<vmem>>, %arg6: memref<1x1xf32, #tpu.memory_space<vmem>>, %arg7: memref<1x1xf32, #tpu.memory_space<vmem>>, %arg8: memref<8x72xbf16, #tpu.memory_space<vmem>>) attributes {dimension_semantics = [], scalar_prefetch = 0 : i64, scratch_operands = 0 : i64, tpu.core_type = #tpu.core_type<tc>} {
    %c0 = arith.constant 0 : index
    %c0_0 = arith.constant 0 : index
    %0 = vector.load %arg0[%c0, %c0_0] : memref<8x72xf32, #tpu.memory_space<vmem>>, vector<8x72xf32>
    %c0_1 = arith.constant 0 : index
    %c0_2 = arith.constant 0 : index
    %1 = vector.load %arg1[%c0_1, %c0_2] : memref<8x72xf32, #tpu.memory_space<vmem>>, vector<8x72xf32>
    %c0_3 = arith.constant 0 : index
    %c0_4 = arith.constant 0 : index
    %2 = vector.load %arg2[%c0_3, %c0_4] : memref<8x72xf32, #tpu.memory_space<vmem>>, vector<8x72xf32>
    %c0_5 = arith.constant 0 : index
    %c0_6 = arith.constant 0 : index
    %3 = vector.load %arg3[%c0_5, %c0_6] : memref<8x72xf32, #tpu.memory_space<vmem>>, vector<8x72xf32>
    %c0_7 = arith.constant 0 : index
    %c0_8 = arith.constant 0 : index
    %4 = vector.load %arg4[%c0_7, %c0_8] : memref<1x72xf32, #tpu.memory_space<vmem>>, vector<1x72xf32>
    %c0_9 = arith.constant 0 : index
    %c0_10 = arith.constant 0 : index
    %5 = vector.load %arg5[%c0_9, %c0_10] : memref<1x72xf32, #tpu.memory_space<vmem>>, vector<1x72xf32>
    %c0_11 = arith.constant 0 : index
    %c0_12 = arith.constant 0 : index
    %6 = vector.load %arg6[%c0_11, %c0_12] : memref<1x1xf32, #tpu.memory_space<vmem>>, vector<1x1xf32>
    %c0_13 = arith.constant 0 : index
    %c0_14 = arith.constant 0 : index
    %7 = vector.load %arg7[%c0_13, %c0_14] : memref<1x1xf32, #tpu.memory_space<vmem>>, vector<1x1xf32>
    %8 = math.cos %1 : vector<8x72xf32>
    %9 = math.sin %1 : vector<8x72xf32>
    %10 = vector.broadcast %4 : vector<1x72xf32> to vector<8x72xf32>
    %11 = arith.mulf %10, %8 : vector<8x72xf32>
    %12 = vector.broadcast %5 : vector<1x72xf32> to vector<8x72xf32>
    %13 = arith.mulf %12, %9 : vector<8x72xf32>
    %14 = arith.addf %11, %13 : vector<8x72xf32>
    %cst = arith.constant 0.000000e+00 : f32
    %15 = vector.broadcast %cst : f32 to vector<1x72xf32>
    %16 = arith.subf %15, %4 : vector<1x72xf32>
    %17 = vector.broadcast %16 : vector<1x72xf32> to vector<8x72xf32>
    %18 = arith.mulf %17, %9 : vector<8x72xf32>
    %19 = vector.broadcast %5 : vector<1x72xf32> to vector<8x72xf32>
    %20 = arith.mulf %19, %8 : vector<8x72xf32>
    %21 = arith.addf %18, %20 : vector<8x72xf32>
    %22 = arith.mulf %14, %14 : vector<8x72xf32>
    %23 = arith.mulf %21, %21 : vector<8x72xf32>
    %24 = arith.addf %22, %23 : vector<8x72xf32>
    %cst_15 = arith.constant 1.000000e-03 : f32
    %25 = vector.broadcast %cst_15 : f32 to vector<8x72xf32>
    %26 = arith.addf %24, %25 : vector<8x72xf32>
    %27 = math.sqrt %26 : vector<8x72xf32>
    %28 = math.log %6 : vector<1x1xf32>
    %29 = math.log %2 : vector<8x72xf32>
    %30 = vector.broadcast %28 : vector<1x1xf32> to vector<8x72xf32>
    %31 = arith.subf %29, %30 : vector<8x72xf32>
    %cst_16 = arith.constant 2.000000e+00 : f32
    %32 = vector.broadcast %cst_16 : f32 to vector<8x72xf32>
    %33 = arith.mulf %32, %31 : vector<8x72xf32>
    %34 = tpu.reciprocal %33 : vector<8x72xf32> -> vector<8x72xf32>
    %35 = math.log %27 : vector<8x72xf32>
    %36 = vector.broadcast %28 : vector<1x1xf32> to vector<8x72xf32>
    %37 = arith.subf %35, %36 : vector<8x72xf32>
    %38 = arith.mulf %37, %34 : vector<8x72xf32>
    %39 = arith.mulf %38, %38 : vector<8x72xf32>
    %cst_17 = arith.constant 0.000000e+00 : f32
    %40 = vector.broadcast %cst_17 : f32 to vector<8x72xf32>
    %41 = arith.subf %40, %39 : vector<8x72xf32>
    %42 = math.exp %41 : vector<8x72xf32>
    %cst_18 = arith.constant 2.000000e+00 : f32
    %43 = vector.broadcast %cst_18 : f32 to vector<8x72xf32>
    %44 = arith.mulf %43, %2 : vector<8x72xf32>
    %45 = arith.mulf %44, %2 : vector<8x72xf32>
    %46 = tpu.reciprocal %45 : vector<8x72xf32> -> vector<8x72xf32>
    %47 = vector.broadcast %7 : vector<1x1xf32> to vector<8x72xf32>
    %48 = arith.subf %1, %47 : vector<8x72xf32>
    %49 = arith.mulf %48, %48 : vector<8x72xf32>
    %cst_19 = arith.constant 0.000000e+00 : f32
    %50 = vector.broadcast %cst_19 : f32 to vector<8x72xf32>
    %51 = arith.subf %50, %49 : vector<8x72xf32>
    %52 = arith.mulf %51, %46 : vector<8x72xf32>
    %53 = math.exp %52 : vector<8x72xf32>
    %54 = arith.mulf %42, %53 : vector<8x72xf32>
    %55 = arith.mulf %0, %27 : vector<8x72xf32>
    %56 = arith.addf %55, %3 : vector<8x72xf32>
    %57 = math.cos %56 : vector<8x72xf32>
    %58 = arith.mulf %54, %57 : vector<8x72xf32>
    %cst_20 = arith.constant 0.318309873 : f32
    %59 = vector.broadcast %cst_20 : f32 to vector<8x72xf32>
    %60 = arith.mulf %46, %59 : vector<8x72xf32>
    %61 = arith.mulf %58, %60 : vector<8x72xf32>
    %62 = arith.truncf %61 : vector<8x72xf32> to vector<8x72xbf16>
    %c0_21 = arith.constant 0 : index
    %c0_22 = arith.constant 0 : index
    %63 = vector.load %arg8[%c0_21, %c0_22] : memref<8x72xbf16, #tpu.memory_space<vmem>>, vector<8x72xbf16>
    tpu.vector_store %arg8[%c0_21, %c0_22], %62 {strides = array<i32>} : memref<8x72xbf16, #tpu.memory_space<vmem>>, vector<8x72xbf16>,
    return
  }
}

module attributes {stable_mosaic.version = 11 : i64} {
  func.func @fused_conv_kernel(%arg0: i32, %arg1: i32, %arg2: memref<1x8x258xbf16, #tpu.memory_space<vmem>>, %arg3: memref<8x72xbf16, #tpu.memory_space<vmem>>, %arg4: memref<1x8x224xf32, #tpu.memory_space<vmem>>) attributes {dimension_semantics = [#tpu.dimension_semantics<parallel>, #tpu.dimension_semantics<parallel>], iteration_bounds = array<i64: 2, 1>, scalar_prefetch = 0 : i64, scratch_operands = 0 : i64, tpu.core_type = #tpu.core_type<tc>, window_params = [{transform_indices = @transform_0, window_bounds = array<i64: 1, 8, 258>}, {pipeline_mode = #tpu.pipeline_mode<synchronous>, transform_indices = @transform_1, window_bounds = array<i64: 8, 72>}, {transform_indices = @transform_2, window_bounds = array<i64: 1, 8, 224>}]} {
    %cst = arith.constant 0.000000e+00 : f32
    %0 = vector.broadcast %cst : f32 to vector<8x224xf32>
    %c0 = arith.constant 0 : index
    %c0_0 = arith.constant 0 : index
    %c0_1 = arith.constant 0 : index
    %1 = vector.load %arg2[%c0, %c0_0, %c0_1] : memref<1x8x258xbf16, #tpu.memory_space<vmem>>, vector<1x8x224xbf16>
    %2 = vector.shape_cast %1 : vector<1x8x224xbf16> to vector<8x224xbf16>
    %c0_2 = arith.constant 0 : index
    %c0_3 = arith.constant 0 : index
    %3 = vector.load %arg3[%c0_2, %c0_3] : memref<8x72xbf16, #tpu.memory_space<vmem>>, vector<8x8xbf16>
    %cst_4 = arith.constant dense<0.000000e+00> : vector<8x224xf32>
    %4 = tpu.matmul %3, %2, %cst_4 {dimension_numbers = #tpu.dot_dimension_numbers<[1], [0], [0], [1], [0, 0, 1, 1], [], []>} : vector<8x8xbf16>, vector<8x224xbf16>, vector<8x224xf32> -> vector<8x224xf32>
    %5 = arith.addf %0, %4 : vector<8x224xf32>
    %c0_5 = arith.constant 0 : index
    %c0_6 = arith.constant 0 : index
    %c1 = arith.constant 1 : index
    %6 = vector.load %arg2[%c0_5, %c0_6, %c1] : memref<1x8x258xbf16, #tpu.memory_space<vmem>>, vector<1x8x224xbf16>
    %7 = vector.shape_cast %6 : vector<1x8x224xbf16> to vector<8x224xbf16>
    %c0_7 = arith.constant 0 : index
    %c8 = arith.constant 8 : index
    %8 = vector.load %arg3[%c0_7, %c8] : memref<8x72xbf16, #tpu.memory_space<vmem>>, vector<8x8xbf16>
    %cst_8 = arith.constant dense<0.000000e+00> : vector<8x224xf32>
    %9 = tpu.matmul %8, %7, %cst_8 {dimension_numbers = #tpu.dot_dimension_numbers<[1], [0], [0], [1], [0, 0, 1, 1], [], []>} : vector<8x8xbf16>, vector<8x224xbf16>, vector<8x224xf32> -> vector<8x224xf32>
    %10 = arith.addf %5, %9 : vector<8x224xf32>
    %c0_9 = arith.constant 0 : index
    %c0_10 = arith.constant 0 : index
    %c2 = arith.constant 2 : index
    %11 = vector.load %arg2[%c0_9, %c0_10, %c2] : memref<1x8x258xbf16, #tpu.memory_space<vmem>>, vector<1x8x224xbf16>
    %12 = vector.shape_cast %11 : vector<1x8x224xbf16> to vector<8x224xbf16>
    %c0_11 = arith.constant 0 : index
    %c16 = arith.constant 16 : index
    %13 = vector.load %arg3[%c0_11, %c16] : memref<8x72xbf16, #tpu.memory_space<vmem>>, vector<8x8xbf16>
    %cst_12 = arith.constant dense<0.000000e+00> : vector<8x224xf32>
    %14 = tpu.matmul %13, %12, %cst_12 {dimension_numbers = #tpu.dot_dimension_numbers<[1], [0], [0], [1], [0, 0, 1, 1], [], []>} : vector<8x8xbf16>, vector<8x224xbf16>, vector<8x224xf32> -> vector<8x224xf32>
    %15 = arith.addf %10, %14 : vector<8x224xf32>
    %c0_13 = arith.constant 0 : index
    %c0_14 = arith.constant 0 : index
    %c16_15 = arith.constant 16 : index
    %16 = vector.load %arg2[%c0_13, %c0_14, %c16_15] : memref<1x8x258xbf16, #tpu.memory_space<vmem>>, vector<1x8x224xbf16>
    %17 = vector.shape_cast %16 : vector<1x8x224xbf16> to vector<8x224xbf16>
    %c0_16 = arith.constant 0 : index
    %c24 = arith.constant 24 : index
    %18 = vector.load %arg3[%c0_16, %c24] : memref<8x72xbf16, #tpu.memory_space<vmem>>, vector<8x8xbf16>
    %cst_17 = arith.constant dense<0.000000e+00> : vector<8x224xf32>
    %19 = tpu.matmul %18, %17, %cst_17 {dimension_numbers = #tpu.dot_dimension_numbers<[1], [0], [0], [1], [0, 0, 1, 1], [], []>} : vector<8x8xbf16>, vector<8x224xbf16>, vector<8x224xf32> -> vector<8x224xf32>
    %20 = arith.addf %15, %19 : vector<8x224xf32>
    %c0_18 = arith.constant 0 : index
    %c0_19 = arith.constant 0 : index
    %c17 = arith.constant 17 : index
    %21 = vector.load %arg2[%c0_18, %c0_19, %c17] : memref<1x8x258xbf16, #tpu.memory_space<vmem>>, vector<1x8x224xbf16>
    %22 = vector.shape_cast %21 : vector<1x8x224xbf16> to vector<8x224xbf16>
    %c0_20 = arith.constant 0 : index
    %c32 = arith.constant 32 : index
    %23 = vector.load %arg3[%c0_20, %c32] : memref<8x72xbf16, #tpu.memory_space<vmem>>, vector<8x8xbf16>
    %cst_21 = arith.constant dense<0.000000e+00> : vector<8x224xf32>
    %24 = tpu.matmul %23, %22, %cst_21 {dimension_numbers = #tpu.dot_dimension_numbers<[1], [0], [0], [1], [0, 0, 1, 1], [], []>} : vector<8x8xbf16>, vector<8x224xbf16>, vector<8x224xf32> -> vector<8x224xf32>
    %25 = arith.addf %20, %24 : vector<8x224xf32>
    %c0_22 = arith.constant 0 : index
    %c0_23 = arith.constant 0 : index
    %c18 = arith.constant 18 : index
    %26 = vector.load %arg2[%c0_22, %c0_23, %c18] : memref<1x8x258xbf16, #tpu.memory_space<vmem>>, vector<1x8x224xbf16>
    %27 = vector.shape_cast %26 : vector<1x8x224xbf16> to vector<8x224xbf16>
    %c0_24 = arith.constant 0 : index
    %c40 = arith.constant 40 : index
    %28 = vector.load %arg3[%c0_24, %c40] : memref<8x72xbf16, #tpu.memory_space<vmem>>, vector<8x8xbf16>
    %cst_25 = arith.constant dense<0.000000e+00> : vector<8x224xf32>
    %29 = tpu.matmul %28, %27, %cst_25 {dimension_numbers = #tpu.dot_dimension_numbers<[1], [0], [0], [1], [0, 0, 1, 1], [], []>} : vector<8x8xbf16>, vector<8x224xbf16>, vector<8x224xf32> -> vector<8x224xf32>
    %30 = arith.addf %25, %29 : vector<8x224xf32>
    %c0_26 = arith.constant 0 : index
    %c0_27 = arith.constant 0 : index
    %c32_28 = arith.constant 32 : index
    %31 = vector.load %arg2[%c0_26, %c0_27, %c32_28] : memref<1x8x258xbf16, #tpu.memory_space<vmem>>, vector<1x8x224xbf16>
    %32 = vector.shape_cast %31 : vector<1x8x224xbf16> to vector<8x224xbf16>
    %c0_29 = arith.constant 0 : index
    %c48 = arith.constant 48 : index
    %33 = vector.load %arg3[%c0_29, %c48] : memref<8x72xbf16, #tpu.memory_space<vmem>>, vector<8x8xbf16>
    %cst_30 = arith.constant dense<0.000000e+00> : vector<8x224xf32>
    %34 = tpu.matmul %33, %32, %cst_30 {dimension_numbers = #tpu.dot_dimension_numbers<[1], [0], [0], [1], [0, 0, 1, 1], [], []>} : vector<8x8xbf16>, vector<8x224xbf16>, vector<8x224xf32> -> vector<8x224xf32>
    %35 = arith.addf %30, %34 : vector<8x224xf32>
    %c0_31 = arith.constant 0 : index
    %c0_32 = arith.constant 0 : index
    %c33 = arith.constant 33 : index
    %36 = vector.load %arg2[%c0_31, %c0_32, %c33] : memref<1x8x258xbf16, #tpu.memory_space<vmem>>, vector<1x8x224xbf16>
    %37 = vector.shape_cast %36 : vector<1x8x224xbf16> to vector<8x224xbf16>
    %c0_33 = arith.constant 0 : index
    %c56 = arith.constant 56 : index
    %38 = vector.load %arg3[%c0_33, %c56] : memref<8x72xbf16, #tpu.memory_space<vmem>>, vector<8x8xbf16>
    %cst_34 = arith.constant dense<0.000000e+00> : vector<8x224xf32>
    %39 = tpu.matmul %38, %37, %cst_34 {dimension_numbers = #tpu.dot_dimension_numbers<[1], [0], [0], [1], [0, 0, 1, 1], [], []>} : vector<8x8xbf16>, vector<8x224xbf16>, vector<8x224xf32> -> vector<8x224xf32>
    %40 = arith.addf %35, %39 : vector<8x224xf32>
    %c0_35 = arith.constant 0 : index
    %c0_36 = arith.constant 0 : index
    %c34 = arith.constant 34 : index
    %41 = vector.load %arg2[%c0_35, %c0_36, %c34] : memref<1x8x258xbf16, #tpu.memory_space<vmem>>, vector<1x8x224xbf16>
    %42 = vector.shape_cast %41 : vector<1x8x224xbf16> to vector<8x224xbf16>
    %c0_37 = arith.constant 0 : index
    %c64 = arith.constant 64 : index
    %43 = vector.load %arg3[%c0_37, %c64] : memref<8x72xbf16, #tpu.memory_space<vmem>>, vector<8x8xbf16>
    %cst_38 = arith.constant dense<0.000000e+00> : vector<8x224xf32>
    %44 = tpu.matmul %43, %42, %cst_38 {dimension_numbers = #tpu.dot_dimension_numbers<[1], [0], [0], [1], [0, 0, 1, 1], [], []>} : vector<8x8xbf16>, vector<8x224xbf16>, vector<8x224xf32> -> vector<8x224xf32>
    %45 = arith.addf %40, %44 : vector<8x224xf32>
    %c0_39 = arith.constant 0 : index
    %c0_40 = arith.constant 0 : index
    %c0_41 = arith.constant 0 : index
    %46 = vector.load %arg4[%c0_39, %c0_40, %c0_41] : memref<1x8x224xf32, #tpu.memory_space<vmem>>, vector<1x8x224xf32>
    %47 = vector.shape_cast %46 : vector<1x8x224xf32> to vector<8x224xf32>
    %48 = vector.shape_cast %45 : vector<8x224xf32> to vector<1x8x224xf32>
    tpu.vector_store %arg4[%c0_39, %c0_40, %c0_41], %48 {strides = array<i32>} : memref<1x8x224xf32, #tpu.memory_space<vmem>>, vector<1x8x224xf32>,
    return
  }
  func.func @transform_0(%arg0: i32, %arg1: i32) -> (i32, i32, i32) {
    %c0_i32 = arith.constant 0 : i32
    %c0_i32_0 = arith.constant 0 : i32
    %c0_i32_1 = arith.constant 0 : i32
    return %arg0, %c0_i32, %c0_i32_0 : i32, i32, i32
  }
  func.func @transform_1(%arg0: i32, %arg1: i32) -> (i32, i32) {
    %c0_i32 = arith.constant 0 : i32
    %c0_i32_0 = arith.constant 0 : i32
    %c0_i32_1 = arith.constant 0 : i32
    return %c0_i32, %c0_i32_0 : i32, i32
  }
  func.func @transform_2(%arg0: i32, %arg1: i32) -> (i32, i32, i32) {
    %c0_i32 = arith.constant 0 : i32
    %c0_i32_0 = arith.constant 0 : i32
    return %arg0, %c0_i32, %arg1 : i32, i32, i32
  }
}

</mosaic_0001>

<llo_original>
// kernel: tile.24
$region0: #{tile.24}
  %s0 = inlined_call_operand.vmem [shape: f32[8,9,8], index: 0, kind: input, shape index: {}]
  %s1 = inlined_call_operand.vmem [shape: f32[8,72], index: 1, kind: output, shape index: {}]
  %s2 = smov 3
  %v3 = vld [vmem:[%s0] ss:$16 sm:%s2]
  %s4 = smov 12
  %v5 = vld [vmem:[%s0] ss:$16 sm:%s4]
  %vm6 = vcmask 1043458
  %v7 = vsel %vm6, %v5, %v3
  %s8 = smov 48
  %v9 = vld [vmem:[%s0] ss:$16 sm:%s8]
  %vm10 = vcmask 1045508
  %v11 = vsel %vm10, %v9, %v7
  %s12 = smov 192
  %v13 = vld [vmem:[%s0] ss:$16 sm:%s12]
  %vm14 = vcmask 1047558
  %v15 = vsel %vm14, %v13, %v11
  %vm16 = vcmask 64512
  %17 = vst.msk [vmem:[%s1] sm:$0xff] %vm16, %v15
  %s18 = scalar_lea.vmem %s0, 8
  %s19 = smov 3
  %v20 = vld [vmem:[%s18] ss:$16 sm:%s19]
  %s21 = scalar_lea.vmem %s0, 8
  %s22 = smov 12
  %v23 = vld [vmem:[%s21] ss:$16 sm:%s22]
  %vm24 = vcmask 1043458
  %v25 = vsel %vm24, %v23, %v20
  %s26 = scalar_lea.vmem %s0, 8
  %s27 = smov 48
  %v28 = vld [vmem:[%s26] ss:$16 sm:%s27]
  %vm29 = vcmask 1045508
  %v30 = vsel %vm29, %v28, %v25
  %s31 = scalar_lea.vmem %s0, 8
  %s32 = smov 192
  %v33 = vld [vmem:[%s31] ss:$16 sm:%s32]
  %vm34 = vcmask 1047558
  %v35 = vsel %vm34, %v33, %v30
  %36 = vrot.lane.b32.xlu0 %v35, 64
  %v37 = vpop.permute.xlu0 %36
  %vm38 = vcmask 589312
  %39 = vst.msk [vmem:[%s1] sm:$0xff] %vm38, %v37
  %s40 = scalar_lea.vmem %s0, 7
  %s41 = smov 3
  %v42 = vld [vmem:[%s40] ss:$16 sm:%s41]
  %s43 = scalar_lea.vmem %s0, 7
  %s44 = smov 12
  %v45 = vld [vmem:[%s43] ss:$16 sm:%s44]
  %vm46 = vcmask 1043458
  %v47 = vsel %vm46, %v45, %v42
  %s48 = scalar_lea.vmem %s0, 7
  %s49 = smov 48
  %v50 = vld [vmem:[%s48] ss:$16 sm:%s49]
  %vm51 = vcmask 1045508
  %v52 = vsel %vm51, %v50, %v47
  %s53 = scalar_lea.vmem %s0, 7
  %s54 = smov 192
  %v55 = vld [vmem:[%s53] ss:$16 sm:%s54]
  %vm56 = vcmask 1047558
  %v57 = vsel %vm56, %v55, %v52
  %58 = vrot.lane.b32.xlu0 %v57, 56
  %v59 = vpop.permute.xlu0 %58
  %vm60 = vcmask 523712
  %61 = vst.msk [vmem:[%s1] sm:$0xff] %vm60, %v59
  %s62 = scalar_lea.vmem %s0, 6
  %s63 = smov 3
  %v64 = vld [vmem:[%s62] ss:$16 sm:%s63]
  %s65 = scalar_lea.vmem %s0, 6
  %s66 = smov 12
  %v67 = vld [vmem:[%s65] ss:$16 sm:%s66]
  %vm68 = vcmask 1043458
  %v69 = vsel %vm68, %v67, %v64
  %s70 = scalar_lea.vmem %s0, 6
  %s71 = smov 48
  %v72 = vld [vmem:[%s70] ss:$16 sm:%s71]
  %vm73 = vcmask 1045508
  %v74 = vsel %vm73, %v72, %v69
  %s75 = scalar_lea.vmem %s0, 6
  %s76 = smov 192
  %v77 = vld [vmem:[%s75] ss:$16 sm:%s76]
  %vm78 = vcmask 1047558
  %v79 = vsel %vm78, %v77, %v74
  %80 = vrot.lane.b32.xlu0 %v79, 48
  %v81 = vpop.permute.xlu0 %80
  %vm82 = vcmask 458112
  %83 = vst.msk [vmem:[%s1] sm:$0xff] %vm82, %v81
  %s84 = scalar_lea.vmem %s0, 5
  %s85 = smov 3
  %v86 = vld [vmem:[%s84] ss:$16 sm:%s85]
  %s87 = scalar_lea.vmem %s0, 5
  %s88 = smov 12
  %v89 = vld [vmem:[%s87] ss:$16 sm:%s88]
  %vm90 = vcmask 1043458
  %v91 = vsel %vm90, %v89, %v86
  %s92 = scalar_lea.vmem %s0, 5
  %s93 = smov 48
  %v94 = vld [vmem:[%s92] ss:$16 sm:%s93]
  %vm95 = vcmask 1045508
  %v96 = vsel %vm95, %v94, %v91
  %s97 = scalar_lea.vmem %s0, 5
  %s98 = smov 192
  %v99 = vld [vmem:[%s97] ss:$16 sm:%s98]
  %vm100 = vcmask 1047558
  %v101 = vsel %vm100, %v99, %v96
  %102 = vrot.lane.b32.xlu0 %v101, 40
  %v103 = vpop.permute.xlu0 %102
  %vm104 = vcmask 392512
  %105 = vst.msk [vmem:[%s1] sm:$0xff] %vm104, %v103
  %s106 = scalar_lea.vmem %s0, 4
  %s107 = smov 3
  %v108 = vld [vmem:[%s106] ss:$16 sm:%s107]
  %s109 = scalar_lea.vmem %s0, 4
  %s110 = smov 12
  %v111 = vld [vmem:[%s109] ss:$16 sm:%s110]
  %vm112 = vcmask 1043458
  %v113 = vsel %vm112, %v111, %v108
  %s114 = scalar_lea.vmem %s0, 4
  %s115 = smov 48
  %v116 = vld [vmem:[%s114] ss:$16 sm:%s115]
  %vm117 = vcmask 1045508
  %v118 = vsel %vm117, %v116, %v113
  %s119 = scalar_lea.vmem %s0, 4
  %s120 = smov 192
  %v121 = vld [vmem:[%s119] ss:$16 sm:%s120]
  %vm122 = vcmask 1047558
  %v123 = vsel %vm122, %v121, %v118
  %124 = vrot.lane.b32.xlu0 %v123, 32
  %v125 = vpop.permute.xlu0 %124
  %vm126 = vcmask 326912
  %127 = vst.msk [vmem:[%s1] sm:$0xff] %vm126, %v125
  %s128 = scalar_lea.vmem %s0, 3
  %s129 = smov 3
  %v130 = vld [vmem:[%s128] ss:$16 sm:%s129]
  %s131 = scalar_lea.vmem %s0, 3
  %s132 = smov 12
  %v133 = vld [vmem:[%s131] ss:$16 sm:%s132]
  %vm134 = vcmask 1043458
  %v135 = vsel %vm134, %v133, %v130
  %s136 = scalar_lea.vmem %s0, 3
  %s137 = smov 48
  %v138 = vld [vmem:[%s136] ss:$16 sm:%s137]
  %vm139 = vcmask 1045508
  %v140 = vsel %vm139, %v138, %v135
  %s141 = scalar_lea.vmem %s0, 3
  %s142 = smov 192
  %v143 = vld [vmem:[%s141] ss:$16 sm:%s142]
  %vm144 = vcmask 1047558
  %v145 = vsel %vm144, %v143, %v140
  %146 = vrot.lane.b32.xlu0 %v145, 24
  %v147 = vpop.permute.xlu0 %146
  %vm148 = vcmask 261312
  %149 = vst.msk [vmem:[%s1] sm:$0xff] %vm148, %v147
  %s150 = scalar_lea.vmem %s0, 2
  %s151 = smov 3
  %v152 = vld [vmem:[%s150] ss:$16 sm:%s151]
  %s153 = scalar_lea.vmem %s0, 2
  %s154 = smov 12
  %v155 = vld [vmem:[%s153] ss:$16 sm:%s154]
  %vm156 = vcmask 1043458
  %v157 = vsel %vm156, %v155, %v152
  %s158 = scalar_lea.vmem %s0, 2
  %s159 = smov 48
  %v160 = vld [vmem:[%s158] ss:$16 sm:%s159]
  %vm161 = vcmask 1045508
  %v162 = vsel %vm161, %v160, %v157
  %s163 = scalar_lea.vmem %s0, 2
  %s164 = smov 192
  %v165 = vld [vmem:[%s163] ss:$16 sm:%s164]
  %vm166 = vcmask 1047558
  %v167 = vsel %vm166, %v165, %v162
  %168 = vrot.lane.b32.xlu0 %v167, 16
  %v169 = vpop.permute.xlu0 %168
  %vm170 = vcmask 195712
  %171 = vst.msk [vmem:[%s1] sm:$0xff] %vm170, %v169
  %s172 = scalar_lea.vmem %s0, 1
  %s173 = smov 3
  %v174 = vld [vmem:[%s172] ss:$16 sm:%s173]
  %s175 = scalar_lea.vmem %s0, 1
  %s176 = smov 12
  %v177 = vld [vmem:[%s175] ss:$16 sm:%s176]
  %vm178 = vcmask 1043458
  %v179 = vsel %vm178, %v177, %v174
  %s180 = scalar_lea.vmem %s0, 1
  %s181 = smov 48
  %v182 = vld [vmem:[%s180] ss:$16 sm:%s181]
  %vm183 = vcmask 1045508
  %v184 = vsel %vm183, %v182, %v179
  %s185 = scalar_lea.vmem %s0, 1
  %s186 = smov 192
  %v187 = vld [vmem:[%s185] ss:$16 sm:%s186]
  %vm188 = vcmask 1047558
  %v189 = vsel %vm188, %v187, %v184
  %190 = vrot.lane.b32.xlu0 %v189, 8
  %v191 = vpop.permute.xlu0 %190
  %vm192 = vcmask 130112
  %193 = vst.msk [vmem:[%s1] sm:$0xff] %vm192, %v191

// kernel: frequency_log_gabor_conv2d.2
$region0: #{frequency_log_gabor_conv2d.2}
  #allocation0 [shape = 'u32[]', space=smem, size = 0x4, offset = 0x4, fixed_abs, tag = 'smem constant byte address 0x4 - core index']
  #allocation1 [shape = 'u32[144,128]{1,0:T(1,128)}', space=vmem, size = 0x12000, scoped, tag = 'internal scratch']
  #allocation2 [shape = 'f32[1,1]{1,0:T(1,128)S(1)}', space=vmem, size = 0x200, scoped, tag = 'scoped memory for frequency_log_gabor_conv2d.2']
  #allocation3 [shape = 'f32[1,1]{1,0:T(1,128)S(1)}', space=vmem, size = 0x200, scoped, tag = 'scoped memory for frequency_log_gabor_conv2d.2']
  %s0 = inlined_call_operand.vmem [shape: f32[8,72], index: 0, kind: input, shape index: {}]
  %s1 = inlined_call_operand.vmem [shape: f32[8,72], index: 1, kind: input, shape index: {}]
  %s2 = inlined_call_operand.vmem [shape: f32[8,72], index: 2, kind: input, shape index: {}]
  %s3 = inlined_call_operand.vmem [shape: f32[8,72], index: 3, kind: input, shape index: {}]
  %s4 = inlined_call_operand.vmem [shape: f32[1,72], index: 4, kind: input, shape index: {}]
  %s5 = inlined_call_operand.vmem [shape: f32[1,72], index: 5, kind: input, shape index: {}]
  %s6 = inlined_call_operand.<no memory space> [shape: f32[1,1], index: 6, kind: input, shape index: {}]
  %s7 = inlined_call_operand.<no memory space> [shape: f32[1,1], index: 7, kind: input, shape index: {}]
  %s8 = inlined_call_operand.vmem [shape: bf16[8,72], index: 8, kind: output, shape index: {}]
  %s9 = sld [smem:[#allocation0]]
  $region42: #{frequency_log_gabor_conv2d.2} parent=0
    _
  %s11 = ssub.s32 1, %s9
  %s12 = scalar_select 0, %s11, %s9
  %v13 = vstv %s6
  %14 = vst [vmem:[#allocation2] sm:$0x1] %v13
  %v15 = vstv %s7
  %16 = vst [vmem:[#allocation3] sm:$0x1] %v15
  // Predicated region
  $region2: #{frequency_log_gabor_conv2d.2} parent=0 // pred_check
    _
  $region3: #{frequency_log_gabor_conv2d.2} parent=0 // pred_check_branch
    %18 = sbr.rel (0) target = $region5
  $region4: #{frequency_log_gabor_conv2d.2} parent=0 // pred_region
    _
  $region5: #{frequency_log_gabor_conv2d.2} parent=0 // pred_fallthru
    _
  // Predicated region
  $region6: #{frequency_log_gabor_conv2d.2} parent=0 // pred_check
    _
  $region7: #{frequency_log_gabor_conv2d.2} parent=0 // pred_check_branch
    %20 = sbr.rel (0) target = $region9
  $region8: #{frequency_log_gabor_conv2d.2} parent=0 // pred_region
    _
  $region9: #{frequency_log_gabor_conv2d.2} parent=0 // pred_fallthru
    _
  // Predicated region
  $region10: #{frequency_log_gabor_conv2d.2} parent=0 // pred_check
    _
  $region11: #{frequency_log_gabor_conv2d.2} parent=0 // pred_check_branch
    %22 = sbr.rel (0) target = $region13
  $region12: #{frequency_log_gabor_conv2d.2} parent=0 // pred_region
    _
  $region13: #{frequency_log_gabor_conv2d.2} parent=0 // pred_fallthru
    _
  // Predicated region
  $region14: #{frequency_log_gabor_conv2d.2} parent=0 // pred_check
    _
  $region15: #{frequency_log_gabor_conv2d.2} parent=0 // pred_check_branch
    %24 = sbr.rel (0) target = $region17
  $region16: #{frequency_log_gabor_conv2d.2} parent=0 // pred_region
    _
  $region17: #{frequency_log_gabor_conv2d.2} parent=0 // pred_fallthru
    _
  // Predicated region
  $region18: #{frequency_log_gabor_conv2d.2} parent=0 // pred_check
    _
  $region19: #{frequency_log_gabor_conv2d.2} parent=0 // pred_check_branch
    %26 = sbr.rel (0) target = $region21
  $region20: #{frequency_log_gabor_conv2d.2} parent=0 // pred_region
    _
  $region21: #{frequency_log_gabor_conv2d.2} parent=0 // pred_fallthru
    _
  // Predicated region
  $region22: #{frequency_log_gabor_conv2d.2} parent=0 // pred_check
    _
  $region23: #{frequency_log_gabor_conv2d.2} parent=0 // pred_check_branch
    %28 = sbr.rel (0) target = $region25
  $region24: #{frequency_log_gabor_conv2d.2} parent=0 // pred_region
    _
  $region25: #{frequency_log_gabor_conv2d.2} parent=0 // pred_fallthru
    _
  // Predicated region
  $region26: #{frequency_log_gabor_conv2d.2} parent=0 // pred_check
    _
  $region27: #{frequency_log_gabor_conv2d.2} parent=0 // pred_check_branch
    %30 = sbr.rel (0) target = $region29
  $region28: #{frequency_log_gabor_conv2d.2} parent=0 // pred_region
    _
  $region29: #{frequency_log_gabor_conv2d.2} parent=0 // pred_fallthru
    _
  // Predicated region
  $region30: #{frequency_log_gabor_conv2d.2} parent=0 // pred_check
    _
  $region31: #{frequency_log_gabor_conv2d.2} parent=0 // pred_check_branch
    %32 = sbr.rel (0) target = $region33
  $region32: #{frequency_log_gabor_conv2d.2} parent=0 // pred_region
    _
  $region33: #{frequency_log_gabor_conv2d.2} parent=0 // pred_fallthru
    _
  %v33 = vld [vmem:[%s0] sm:$0xff]
  %v34 = vld [vmem:[%s1] sm:$0xff]
  %v35 = vld [vmem:[%s2] sm:$0xff]
  %v36 = vld [vmem:[%s3] sm:$0xff]
  %v37 = vld [vmem:[%s4] sm:$0x1]
  %v38 = vld [vmem:[%s5] sm:$0x1]
  %v39 = vld [vmem:[#allocation2] sm:$0x1]
  %v40 = vld [vmem:[#allocation3] sm:$0x1]
  %v41 = vand.u32 2147483647, %v34
  %vm42 = vcmp.le.f32.partialorder %v41, 0.7853982
  %vm43 = vcmp.lt.s32.totalorder %v34, 0
  %v44 = vand.u32 %v34, 2139095040
  %v45 = vshrl.u32 %v44, 23
  %v46 = vsub.s32 %v45, 127
  %v47 = vand.u32 2147483647, %v34
  %v48 = vand.u32 %v47, 8388607
  %v49 = vor.u32 %v48, 8388608
  %v50 = vsub.s32 0, %v49
  %v51 = vadd.s32 %v46, 1
  %vm52 = vcmp.gt.s32.totalorder %v51, 0
  %v53 = vsel %vm52, %v51, 0
  %v54 = vshrl.u32 %v53, 5
  %v55 = vand.u32 %v53, 31
  %v56 = vsub.s32 32, %v55
  %v57 = vshrl.u32 683565275, %v56
  %v58 = vshll.u32 683565275, %v55
  %v59 = vshrl.u32 2475754826, %v56
  %v60 = vor.u32 %v58, %v59
  %v61 = vshll.u32 2475754826, %v55
  %v62 = vshrl.u32 2131351028, %v56
  %v63 = vor.u32 %v61, %v62
  %v64 = vshll.u32 2131351028, %v55
  %v65 = vshrl.u32 2102212464, %v56
  %v66 = vor.u32 %v64, %v65
  %v67 = vshll.u32 2102212464, %v55
  %v68 = vshrl.u32 920167782, %v56
  %v69 = vor.u32 %v67, %v68
  %v70 = vshll.u32 920167782, %v55
  %v71 = vshrl.u32 1326507024, %v56
  %v72 = vor.u32 %v70, %v71
  %vm73 = vcmp.lt.s32.totalorder %v54, 1
  %vm74 = vcmp.lt.s32.totalorder %v54, 2
  %vm75 = vcmp.lt.s32.totalorder %v54, 3
  %vm76 = vcmp.lt.s32.totalorder %v54, 4
  %v77 = vsel %vm73, %v57, %v60
  %v78 = vsel %vm76, %v66, 2102212464
  %v79 = vsel %vm75, %v63, %v78
  %v80 = vsel %vm74, %v77, %v79
  %v81 = vsel %vm73, %v60, %v63
  %v82 = vsel %vm76, %v69, 920167782
  %v83 = vsel %vm75, %v66, %v82
  %v84 = vsel %vm74, %v81, %v83
  %v85 = vsel %vm73, %v63, %v66
  %v86 = vsel %vm76, %v72, 1326507024
  %v87 = vsel %vm75, %v69, %v86
  %v88 = vsel %vm74, %v85, %v87
  %v89 = vshll.u32 %v49, 8
  %v90 = vmul.u32.u64.compose %v89, %v88
  %v91 = vextract.low.u32 %v90
  %v92 = vextract.high.u32 %v90
  %v93 = vmul.u32.u64.compose %v89, %v84
  %v94 = vextract.low.u32 %v93
  %v95 = vextract.high.u32 %v93
  %v96 = vmul.u32 %v89, %v80
  %v97 = vadd.s32 %v92, %v94
  %vm98 = vc.u32 %v92, %v94
  %v99 = vadd.s32 %v95, 1
  %v100 = vsel %vm98, %v99, %v95
  %v101 = vadd.s32 %v96, %v100
  %v102 = vadd.s32 %v101, 536870912
  %v103 = vshrl.u32 %v102, 30
  %v104 = vshll.u32 %v103, 30
  %v105 = vsub.s32 %v101, %v104
  %vm106 = vcmp.lt.s32.totalorder %v105, 0
  %v107 = vsub.s32 0, %v105
  %v108 = vsel %vm106, %v107, %v105
  %v109 = vclz %v108
  %v110 = vsub.s32 %v109, 2
  %vm111 = vcmp.gt.s32.totalorder 0, %v110
  %v112 = vsel %vm111, 0, %v110
  %v113 = vsub.s32 32, %v112
  %v114 = vshll.u32 %v105, %v112
  %v115 = vshrl.u32 %v97, %v113
  %v116 = vor.u32 %v114, %v115
  %v117 = vsub.s32 4294967266, %v112
  %v118 = vadd.s32 %v117, 127
  %v119 = vshll.u32 %v118, 23
  %v120 = vor.u32 4788187, %v119
  %v121 = vand.u32 2147483647, %v120
  %v123 = vcvt.s32.f32 %v116
  %v124 = vmul.f32 %v123, %v121
  %v125 = vxor.u32 %v124, 2147483648
  %v126 = vsel %vm43, %v125, %v124
  %v127 = vsub.s32 4, %v103
  %v128 = vsel %vm43, %v127, %v103
  %v129 = vsel %vm42, %v34, %v126
  %v130 = vsel %vm42, 0, %v128
  %v131 = vcosq.f32.pop %v129
  %v132 = vsinq.f32.pop %v129
  %vm133 = vweird.f32 %v34
  %v134 = vand.u32 %v130, 3
  %vm135 = vcmp.lt.s32.totalorder %v134, 2
  %vm136 = vcmp.eq.s32.totalorder %v134, 0
  %v137 = vxor.u32 %v132, 2147483648
  %v138 = vsel %vm136, %v131, %v137
  %vm139 = vcmp.eq.s32.totalorder %v134, 2
  %v140 = vxor.u32 %v131, 2147483648
  %v141 = vsel %vm139, %v140, %v132
  %v142 = vsel %vm135, %v138, %v141
  %v143 = vsel %vm133, nan, %v142
  %v144 = vand.u32 2147483647, %v34
  %vm145 = vcmp.le.f32.partialorder %v144, 0.7853982
  %vm146 = vcmp.lt.s32.totalorder %v34, 0
  %v147 = vand.u32 %v34, 2139095040
  %v148 = vshrl.u32 %v147, 23
  %v149 = vsub.s32 %v148, 127
  %v150 = vand.u32 2147483647, %v34
  %v151 = vand.u32 %v150, 8388607
  %v152 = vor.u32 %v151, 8388608
  %v153 = vsub.s32 0, %v152
  %v154 = vadd.s32 %v149, 1
  %vm155 = vcmp.gt.s32.totalorder %v154, 0
  %v156 = vsel %vm155, %v154, 0
  %v157 = vshrl.u32 %v156, 5
  %v158 = vand.u32 %v156, 31
  %v159 = vsub.s32 32, %v158
  %v160 = vshrl.u32 683565275, %v159
  %v161 = vshll.u32 683565275, %v158
  %v162 = vshrl.u32 2475754826, %v159
  %v163 = vor.u32 %v161, %v162
  %v164 = vshll.u32 2475754826, %v158
  %v165 = vshrl.u32 2131351028, %v159
  %v166 = vor.u32 %v164, %v165
  %v167 = vshll.u32 2131351028, %v158
  %v168 = vshrl.u32 2102212464, %v159
  %v169 = vor.u32 %v167, %v168
  %v170 = vshll.u32 2102212464, %v158
  %v171 = vshrl.u32 920167782, %v159
  %v172 = vor.u32 %v170, %v171
  %v173 = vshll.u32 920167782, %v158
  %v174 = vshrl.u32 1326507024, %v159
  %v175 = vor.u32 %v173, %v174
  %vm176 = vcmp.lt.s32.totalorder %v157, 1
  %vm177 = vcmp.lt.s32.totalorder %v157, 2
  %vm178 = vcmp.lt.s32.totalorder %v157, 3
  %vm179 = vcmp.lt.s32.totalorder %v157, 4
  %v180 = vsel %vm176, %v160, %v163
  %v181 = vsel %vm179, %v169, 2102212464
  %v182 = vsel %vm178, %v166, %v181
  %v183 = vsel %vm177, %v180, %v182
  %v184 = vsel %vm176, %v163, %v166
  %v185 = vsel %vm179, %v172, 920167782
  %v186 = vsel %vm178, %v169, %v185
  %v187 = vsel %vm177, %v184, %v186
  %v188 = vsel %vm176, %v166, %v169
  %v189 = vsel %vm179, %v175, 1326507024
  %v190 = vsel %vm178, %v172, %v189
  %v191 = vsel %vm177, %v188, %v190
  %v192 = vshll.u32 %v152, 8
  %v193 = vmul.u32.u64.compose %v192, %v191
  %v194 = vextract.low.u32 %v193
  %v195 = vextract.high.u32 %v193
  %v196 = vmul.u32.u64.compose %v192, %v187
  %v197 = vextract.low.u32 %v196
  %v198 = vextract.high.u32 %v196
  %v199 = vmul.u32 %v192, %v183
  %v200 = vadd.s32 %v195, %v197
  %vm201 = vc.u32 %v195, %v197
  %v202 = vadd.s32 %v198, 1
  %v203 = vsel %vm201, %v202, %v198
  %v204 = vadd.s32 %v199, %v203
  %v205 = vadd.s32 %v204, 536870912
  %v206 = vshrl.u32 %v205, 30
  %v207 = vshll.u32 %v206, 30
  %v208 = vsub.s32 %v204, %v207
  %vm209 = vcmp.lt.s32.totalorder %v208, 0
  %v210 = vsub.s32 0, %v208
  %v211 = vsel %vm209, %v210, %v208
  %v212 = vclz %v211
  %v213 = vsub.s32 %v212, 2
  %vm214 = vcmp.gt.s32.totalorder 0, %v213
  %v215 = vsel %vm214, 0, %v213
  %v216 = vsub.s32 32, %v215
  %v217 = vshll.u32 %v208, %v215
  %v218 = vshrl.u32 %v200, %v216
  %v219 = vor.u32 %v217, %v218
  %v220 = vsub.s32 4294967266, %v215
  %v221 = vadd.s32 %v220, 127
  %v222 = vshll.u32 %v221, 23
  %v223 = vor.u32 4788187, %v222
  %v224 = vand.u32 2147483647, %v223
  %v226 = vcvt.s32.f32 %v219
  %v227 = vmul.f32 %v226, %v224
  %v228 = vxor.u32 %v227, 2147483648
  %v229 = vsel %vm146, %v228, %v227
  %v230 = vsub.s32 4, %v206
  %v231 = vsel %vm146, %v230, %v206
  %v232 = vsel %vm145, %v34, %v229
  %v233 = vsel %vm145, 0, %v231
  %v234 = vcosq.f32.pop %v232
  %v235 = vsinq.f32.pop %v232
  %vm236 = vweird.f32 %v34
  %v237 = vadd.s32 %v233, 3
  %v238 = vand.u32 %v237, 3
  %vm239 = vcmp.lt.s32.totalorder %v238, 2
  %vm240 = vcmp.eq.s32.totalorder %v238, 0
  %v241 = vxor.u32 %v235, 2147483648
  %v242 = vsel %vm240, %v234, %v241
  %vm243 = vcmp.eq.s32.totalorder %v238, 2
  %v244 = vxor.u32 %v234, 2147483648
  %v245 = vsel %vm243, %v244, %v235
  %v246 = vsel %vm239, %v242, %v245
  %v247 = vsel %vm236, nan, %v246
  %v249 = vlaneseq
  %v250 = vshrl.u32 %v249, 7
  %v251 = vsub.s32 0, %v250
  %v252 = vrot.slane %v37, %v251
  %v254 = vmul.f32 %v252, %v143
  %v256 = vlaneseq
  %v257 = vshrl.u32 %v256, 7
  %v258 = vsub.s32 0, %v257
  %v259 = vrot.slane %v38, %v258
  %v261 = vmul.f32 %v259, %v247
  %v262 = vadd.f32 %v254, %v261
  %v263 = vsub.f32 0.0, %v37
  %v265 = vlaneseq
  %v266 = vshrl.u32 %v265, 7
  %v267 = vsub.s32 0, %v266
  %v268 = vrot.slane %v263, %v267
  %v270 = vmul.f32 %v268, %v247
  %v271 = vmul.f32 %v259, %v143
  %v272 = vadd.f32 %v270, %v271
  %v273 = vmul.f32 %v262, %v262
  %v274 = vmul.f32 %v272, %v272
  %v275 = vadd.f32 %v273, %v274
  %v276 = vadd.f32 %v275, 0.001
  %v277 = vrsqrt.pop %v276
  %v278 = vmul.f32 %v276, %v277
  %vm279 = vcmp.eq.f32.partialorder %v276, inf
  %v280 = vsel %vm279, %v276, %v278
  %vm281 = vcmp.eq.f32.partialorder %v276, 0.0
  %v282 = vand.u32 %v276, 2147483648
  %v283 = vsel %vm281, %v282, %v280
  %v284 = vlog2.pop %v39
  %v285 = vmul.f32 %v284, 0.6931472
  %v286 = vlog2.pop %v35
  %v287 = vmul.f32 %v286, 0.6931472
  %v289 = vlaneseq
  %v290 = vshrl.u32 %v289, 7
  %v291 = vsub.s32 0, %v290
  %v292 = vrot.slane %v285, %v291
  %293 = vset.pattern.permute.xlu0 0
  %294 = vperm.xlu0 %293, %v292
  %v295 = vpop.permute.xlu0 %294
  %v297 = vsub.f32 %v287, %v295
  %v298 = vmul.f32 %v297, 2.0
  %v299 = vrcp.pop %v298
  %v300 = vlog2.pop %v283
  %v301 = vmul.f32 %v300, 0.6931472
  %v302 = vsub.f32 %v301, %v295
  %v303 = vmul.f32 %v302, %v299
  %v304 = vmul.f32 %v303, %v303
  %v305 = vsub.f32 0.0, %v304
  %v306 = vmul.f32 %v305, 1.442695
  %v307 = vpow.pop %v306
  %v308 = vmul.f32 %v35, 2.0
  %v309 = vmul.f32 %v308, %v35
  %v310 = vrcp.pop %v309
  %v312 = vlaneseq
  %v313 = vshrl.u32 %v312, 7
  %v314 = vsub.s32 0, %v313
  %v315 = vrot.slane %v40, %v314
  %316 = vset.pattern.permute.xlu0 0
  %317 = vperm.xlu0 %316, %v315
  %v318 = vpop.permute.xlu0 %317
  %v320 = vsub.f32 %v34, %v318
  %v321 = vmul.f32 %v320, %v320
  %v322 = vsub.f32 0.0, %v321
  %v323 = vmul.f32 %v322, %v310
  %v324 = vmul.f32 %v323, 1.442695
  %v325 = vpow.pop %v324
  %v326 = vmul.f32 %v307, %v325
  %v327 = vmul.f32 %v33, %v283
  %v328 = vadd.f32 %v327, %v36
  %v329 = vand.u32 2147483647, %v328
  %vm330 = vcmp.le.f32.partialorder %v329, 0.7853982
  %vm331 = vcmp.lt.s32.totalorder %v328, 0
  %v332 = vand.u32 %v328, 2139095040
  %v333 = vshrl.u32 %v332, 23
  %v334 = vsub.s32 %v333, 127
  %v335 = vand.u32 2147483647, %v328
  %v336 = vand.u32 %v335, 8388607
  %v337 = vor.u32 %v336, 8388608
  %v338 = vsub.s32 0, %v337
  %v339 = vadd.s32 %v334, 1
  %vm340 = vcmp.gt.s32.totalorder %v339, 0
  %v341 = vsel %vm340, %v339, 0
  %v342 = vshrl.u32 %v341, 5
  %v343 = vand.u32 %v341, 31
  %v344 = vsub.s32 32, %v343
  %v345 = vshrl.u32 683565275, %v344
  %v346 = vshll.u32 683565275, %v343
  %v347 = vshrl.u32 2475754826, %v344
  %v348 = vor.u32 %v346, %v347
  %v349 = vshll.u32 2475754826, %v343
  %v350 = vshrl.u32 2131351028, %v344
  %v351 = vor.u32 %v349, %v350
  %v352 = vshll.u32 2131351028, %v343
  %v353 = vshrl.u32 2102212464, %v344
  %v354 = vor.u32 %v352, %v353
  %v355 = vshll.u32 2102212464, %v343
  %v356 = vshrl.u32 920167782, %v344
  %v357 = vor.u32 %v355, %v356
  %v358 = vshll.u32 920167782, %v343
  %v359 = vshrl.u32 1326507024, %v344
  %v360 = vor.u32 %v358, %v359
  %vm361 = vcmp.lt.s32.totalorder %v342, 1
  %vm362 = vcmp.lt.s32.totalorder %v342, 2
  %vm363 = vcmp.lt.s32.totalorder %v342, 3
  %vm364 = vcmp.lt.s32.totalorder %v342, 4
  %v365 = vsel %vm361, %v345, %v348
  %v366 = vsel %vm364, %v354, 2102212464
  %v367 = vsel %vm363, %v351, %v366
  %v368 = vsel %vm362, %v365, %v367
  %v369 = vsel %vm361, %v348, %v351
  %v370 = vsel %vm364, %v357, 920167782
  %v371 = vsel %vm363, %v354, %v370
  %v372 = vsel %vm362, %v369, %v371
  %v373 = vsel %vm361, %v351, %v354
  %v374 = vsel %vm364, %v360, 1326507024
  %v375 = vsel %vm363, %v357, %v374
  %v376 = vsel %vm362, %v373, %v375
  %v377 = vshll.u32 %v337, 8
  %v378 = vmul.u32.u64.compose %v377, %v376
  %v379 = vextract.low.u32 %v378
  %v380 = vextract.high.u32 %v378
  %v381 = vmul.u32.u64.compose %v377, %v372
  %v382 = vextract.low.u32 %v381
  %v383 = vextract.high.u32 %v381
  %v384 = vmul.u32 %v377, %v368
  %v385 = vadd.s32 %v380, %v382
  %vm386 = vc.u32 %v380, %v382
  %v387 = vadd.s32 %v383, 1
  %v388 = vsel %vm386, %v387, %v383
  %v389 = vadd.s32 %v384, %v388
  %v390 = vadd.s32 %v389, 536870912
  %v391 = vshrl.u32 %v390, 30
  %v392 = vshll.u32 %v391, 30
  %v393 = vsub.s32 %v389, %v392
  %vm394 = vcmp.lt.s32.totalorder %v393, 0
  %v395 = vsub.s32 0, %v393
  %v396 = vsel %vm394, %v395, %v393
  %v397 = vclz %v396
  %v398 = vsub.s32 %v397, 2
  %vm399 = vcmp.gt.s32.totalorder 0, %v398
  %v400 = vsel %vm399, 0, %v398
  %v401 = vsub.s32 32, %v400
  %v402 = vshll.u32 %v393, %v400
  %v403 = vshrl.u32 %v385, %v401
  %v404 = vor.u32 %v402, %v403
  %v405 = vsub.s32 4294967266, %v400
  %v406 = vadd.s32 %v405, 127
  %v407 = vshll.u32 %v406, 23
  %v408 = vor.u32 4788187, %v407
  %v409 = vand.u32 2147483647, %v408
  %v411 = vcvt.s32.f32 %v404
  %v412 = vmul.f32 %v411, %v409
  %v413 = vxor.u32 %v412, 2147483648
  %v414 = vsel %vm331, %v413, %v412
  %v415 = vsub.s32 4, %v391
  %v416 = vsel %vm331, %v415, %v391
  %v417 = vsel %vm330, %v328, %v414
  %v418 = vsel %vm330, 0, %v416
  %v419 = vcosq.f32.pop %v417
  %v420 = vsinq.f32.pop %v417
  %vm421 = vweird.f32 %v328
  %v422 = vand.u32 %v418, 3
  %vm423 = vcmp.lt.s32.totalorder %v422, 2
  %vm424 = vcmp.eq.s32.totalorder %v422, 0
  %v425 = vxor.u32 %v420, 2147483648
  %v426 = vsel %vm424, %v419, %v425
  %vm427 = vcmp.eq.s32.totalorder %v422, 2
  %v428 = vxor.u32 %v419, 2147483648
  %v429 = vsel %vm427, %v428, %v420
  %v430 = vsel %vm423, %v426, %v429
  %v431 = vsel %vm421, nan, %v430
  %v432 = vmul.f32 %v326, %v431
  %v433 = vmul.f32 %v310, 0.31830987
  %v434 = vmul.f32 %v432, %v433
  %v435 = vpack.c.bf16 %v434, %v434
  %vm436 = vcmask 584704
  %437 = vst.msk [vmem:[%s8] sm:$0xf] %vm436, %v435
  // Predicated region
  $region34: #{frequency_log_gabor_conv2d.2} parent=0 // pred_check
    _
  $region35: #{frequency_log_gabor_conv2d.2} parent=0 // pred_check_branch
    %439 = sbr.rel (0) target = $region37
  $region36: #{frequency_log_gabor_conv2d.2} parent=0 // pred_region
    _
  $region37: #{frequency_log_gabor_conv2d.2} parent=0 // pred_fallthru
    _
  // Predicated region
  $region38: #{frequency_log_gabor_conv2d.2} parent=0 // pred_check
    _
  $region39: #{frequency_log_gabor_conv2d.2} parent=0 // pred_check_branch
    %441 = sbr.rel (0) target = $region41
  $region40: #{frequency_log_gabor_conv2d.2} parent=0 // pred_region
    _
  $region41: #{frequency_log_gabor_conv2d.2} parent=0 // pred_fallthru
    _

// kernel: frequency_log_gabor_conv2d.3
$region0: #{frequency_log_gabor_conv2d.3}
  #allocation0 [shape = 'u32[]', space=smem, size = 0x4, offset = 0x4, fixed_abs, tag = 'smem constant byte address 0x4 - core index']
  #allocation1 [shape = 'u32[144,128]{1,0:T(1,128)}', space=vmem, size = 0x12000, scoped, tag = 'internal scratch']
  %s0 = inlined_call_operand.vmem [shape: bf16[2,8,258], index: 0, kind: input, shape index: {}]
  %s1 = inlined_call_operand.vmem [shape: bf16[8,72], index: 1, kind: input, shape index: {}]
  %s2 = inlined_call_operand.vmem [shape: f32[2,8,224], index: 2, kind: output, shape index: {}]
  %s3 = sld [smem:[#allocation0]]
  $region41: #{frequency_log_gabor_conv2d.3} parent=0
    _
  %s5 = ssub.s32 1, %s3
  %s6 = scalar_select 0, %s5, %s3
  loop: start=0, step=1, limit=4
  $region2: #{frequency_log_gabor_conv2d.3} parent=0 // loop_pre_header
    _
  $region3: #{frequency_log_gabor_conv2d.3} parent=0 // loop_header
    %s8 = sphi 0, %s12
    %p9 = scmp.ge.s32.totalorder %s8, 4
    %s15 = sphi 0, %s27
    %s16 = sphi 0, %s23
    %s17 = sphi 0, %s15
    %s18 = sphi 0, %s16
    %s19 = sphi 0, %s17
    %s20 = sphi 0, %s18
    %s30 = sphi 0, %s32
    %s33 = sphi 0, %s30
    %s34 = sphi 0, %s33
    %s50 = sphi 0, %s34
    %s54 = sphi 0, %s54
    %s56 = sphi 0, %s54
    %s57 = sphi 0, %s56
    %s71 = sphi 0, %s57
    %s79 = sphi 0, %s81
    %s82 = sphi 0, %s79
    %s83 = sphi 0, %s82
    %s99 = sphi 0, %s83
  $region4: #{frequency_log_gabor_conv2d.3} parent=0 // loop_header_branch
    %11 = sbr.rel (%p9) target = $region8
  $region5: #{frequency_log_gabor_conv2d.3} parent=0 // loop_body
    %s13 = ssub.s32 %s8, 1
    %s14 = ssub.s32 %s8, 2
    %s21 = sadd.s32 1, %s16
    %p22 = scmp.ge.s32.totalorder %s21, 1
    %s23 = scalar_select %p22, 0, %s21
    %s24 = sadd.s32 1, %s15
    %s25 = scalar_select %p22, %s24, %s15
    %p26 = scmp.ge.s32.totalorder %s25, 2
    %s27 = scalar_select %p26, 0, %s25
    %s28 = ssub.s32 %s15, %s27
    %p29 = scmp.eq.s32.totalorder %s28, 0
    %s31 = sadd.s32 %s30, 1
    %s32 = scalar_select %p29, %s30, %s31
    %p35 = pneg %p29
    %p36 = scmp.eq.s32.totalorder %s8, 1
    %p37 = por %p35, %p36
    %p38 = scmp.ne.s32.totalorder %s30, %s33
    %p39 = scmp.eq.s32.totalorder %s8, 0
    %p40 = por %p38, %p39
    %p41 = scmp.ne.s32.totalorder %s30, %s33
    %p42 = scmp.eq.s32.totalorder %s13, 1
    %p43 = por %p41, %p42
    %p44 = scmp.ne.s32.totalorder %s33, %s34
    %p45 = scmp.eq.s32.totalorder %s13, 0
    %p46 = por %p44, %p45
    %p47 = scmp.ne.s32.totalorder %s33, %s34
    %p48 = scmp.eq.s32.totalorder %s14, 1
    %p49 = por %p47, %p48
    %p51 = scmp.ne.s32.totalorder %s34, %s50
    %p52 = scmp.eq.s32.totalorder %s14, 0
    %p53 = por %p51, %p52
    %s55 = sadd.s32 %s54, 1
    %p58 = scmp.eq.s32.totalorder %s8, 1
    %p59 = scmp.ne.s32.totalorder %s54, %s56
    %p60 = scmp.eq.s32.totalorder %s8, 0
    %p61 = por %p59, %p60
    %p62 = scmp.ne.s32.totalorder %s54, %s56
    %p63 = scmp.eq.s32.totalorder %s13, 1
    %p64 = por %p62, %p63
    %p65 = scmp.ne.s32.totalorder %s56, %s57
    %p66 = scmp.eq.s32.totalorder %s13, 0
    %p67 = por %p65, %p66
    %p68 = scmp.ne.s32.totalorder %s56, %s57
    %p69 = scmp.eq.s32.totalorder %s14, 1
    %p70 = por %p68, %p69
    %p72 = scmp.ne.s32.totalorder %s57, %s71
    %p73 = scmp.eq.s32.totalorder %s14, 0
    %p74 = por %p72, %p73
    %s75 = ssub.s32 %s15, %s27
    %s76 = ssub.s32 %s16, %s23
    %s77 = sor.u32 %s75, %s76
    %p78 = scmp.eq.s32.totalorder %s77, 0
    %s80 = sadd.s32 %s79, 1
    %s81 = scalar_select %p78, %s79, %s80
    %p84 = pneg %p78
    %p85 = scmp.eq.s32.totalorder %s8, 1
    %p86 = por %p84, %p85
    %p87 = scmp.ne.s32.totalorder %s79, %s82
    %p88 = scmp.eq.s32.totalorder %s8, 0
    %p89 = por %p87, %p88
    %p90 = scmp.ne.s32.totalorder %s79, %s82
    %p91 = scmp.eq.s32.totalorder %s13, 1
    %p92 = por %p90, %p91
    %p93 = scmp.ne.s32.totalorder %s82, %s83
    %p94 = scmp.eq.s32.totalorder %s13, 0
    %p95 = por %p93, %p94
    %p96 = scmp.ne.s32.totalorder %s82, %s83
    %p97 = scmp.eq.s32.totalorder %s14, 1
    %p98 = por %p96, %p97
    %p100 = scmp.ne.s32.totalorder %s83, %s99
    %p101 = scmp.eq.s32.totalorder %s14, 0
    %p102 = por %p100, %p101
    %p103 = scmp.le.s32.totalorder 1, %s8
    %p104 = scmp.lt.s32.totalorder %s8, 3
    %p105 = pnand %p103, %p104
    %p106 = pneg %p105
    // Predicated region
    $region9: #{frequency_log_gabor_conv2d.3} parent=5 // pred_check
      _
    $region10: #{frequency_log_gabor_conv2d.3} parent=5 // pred_check_branch
      %108 = sbr.rel (%p105) target = $region12
    $region11: #{frequency_log_gabor_conv2d.3} parent=5 // pred_region
      %s109 = ssub.s32 %s8, 1
      // Predicated region
      $region13: #{frequency_log_gabor_conv2d.3} parent=11 // pred_check
        %p110 = pneg %p67
      $region14: #{frequency_log_gabor_conv2d.3} parent=11 // pred_check_branch
        %112 = sbr.rel (%p110) target = $region16
      $region15: #{frequency_log_gabor_conv2d.3} parent=11 // pred_region
        _
      $region16: #{frequency_log_gabor_conv2d.3} parent=11 // pred_fallthru
        _
    $region12: #{frequency_log_gabor_conv2d.3} parent=5 // pred_fallthru
      _
    %p113 = scmp.lt.s32.totalorder %s8, 2
    // Predicated region
    $region17: #{frequency_log_gabor_conv2d.3} parent=5 // pred_check
      %p114 = pneg %p113
    $region18: #{frequency_log_gabor_conv2d.3} parent=5 // pred_check_branch
      %116 = sbr.rel (%p114) target = $region20
    $region19: #{frequency_log_gabor_conv2d.3} parent=5 // pred_region
      // Predicated region
      $region21: #{frequency_log_gabor_conv2d.3} parent=19 // pred_check
        %p117 = pneg %p40
      $region22: #{frequency_log_gabor_conv2d.3} parent=19 // pred_check_branch
        %119 = sbr.rel (%p117) target = $region24
      $region23: #{frequency_log_gabor_conv2d.3} parent=19 // pred_region
        %p120 = scmp.lt.s32.totalorder %s15, 1
        %s121 = scalar_select %p120, %s15, 1
        %s122 = smul.addr %s121, 3
        %s123 = smul.addr %s122, 4
        %s124 = scalar_lea.vmem %s0, %s123
      $region24: #{frequency_log_gabor_conv2d.3} parent=19 // pred_fallthru
        _
    $region20: #{frequency_log_gabor_conv2d.3} parent=5 // pred_fallthru
      _
    %p125 = scmp.le.s32.totalorder 1, %s8
    %p126 = scmp.lt.s32.totalorder %s8, 3
    %p127 = pnand %p125, %p126
    %p128 = pneg %p127
    // Predicated region
    $region25: #{frequency_log_gabor_conv2d.3} parent=5 // pred_check
      _
    $region26: #{frequency_log_gabor_conv2d.3} parent=5 // pred_check_branch
      %130 = sbr.rel (%p127) target = $region28
    $region27: #{frequency_log_gabor_conv2d.3} parent=5 // pred_region
      %s131 = ssub.s32 %s8, 1
      %p132 = scmp.lt.s32.totalorder %s17, 1
      %s133 = scalar_select %p132, %s17, 1
      %s134 = smul.addr %s133, 3
      %s135 = smul.addr %s134, 4
      %s136 = scalar_lea.vmem %s0, %s135
      %p137 = pneg %p46
      %p138 = pneg %p43
      %p139 = pneg %p67
      %p140 = pneg %p64
      %p141 = pneg %p95
      %p142 = pneg %p92
      %s143 = smul.u32 2, %s18
      %p144 = scmp.lt.s32.totalorder %s17, 1
      %s145 = scalar_select %p144, %s17, 1
      %p146 = scmp.lt.s32.totalorder %s143, 1
      %s147 = scalar_select %p146, %s143, 1
      %s148 = smul.addr %s145, 2
      %s149 = sadd.s32 %s147, %s148
      %s150 = smul.addr %s149, 8
      %s151 = scalar_lea.vmem %s2, %s150
      %p152 = scmp.lt.s32.totalorder %s17, 1
      %s153 = scalar_select %p152, %s17, 1
      %s154 = smul.addr %s153, 3
      %s155 = smul.addr %s154, 4
      %s156 = scalar_lea.vmem %s0, %s155
      %s157 = smul.u32 2, %s18
      %p158 = scmp.lt.s32.totalorder %s17, 1
      %s159 = scalar_select %p158, %s17, 1
      %p160 = scmp.lt.s32.totalorder %s157, 1
      %s161 = scalar_select %p160, %s157, 1
      %s162 = smul.addr %s159, 2
      %s163 = sadd.s32 %s161, %s162
      %s164 = smul.addr %s163, 8
      %s165 = scalar_lea.vmem %s2, %s164
      %s166 = smul.u32 2, %s18
      %v168 = vld [vmem:[%s156] sm:$0xff]
      %v169 = vld [vmem:[%s1] sm:$0xf]
      %v171 = vunpack.c.l.b16 %v169
      %v172 = vpack.c.b16 %v171, %v171
      %173 = vrot.lane.b32.xlu0 %v172, 120
      %v174 = vpop.permute.xlu0 %173
      %v176 = vunpack.c.l.b16 %v168
      %v177 = vunpack.c.h.b16 %v168
      %v178 = vpack.c.b16 %v176, %v176
      %v179 = vpack.c.b16 %v177, %v177
      %180 = vrot.lane.b32.xlu0 %v178, 127
      %v181 = vpop.permute.xlu0 %180
      %182 = vrot.lane.b32.xlu0 %v179, 127
      %v183 = vpop.permute.xlu0 %182
      %vm184 = vcmask 1039360
      %v185 = vsel %vm184, %v181, %v183
      %vm186 = vcmask 64512
      %v188 = vsel %vm186, %v174, 0
      %vm190 = vcmask 1043456
      %v192 = vsel %vm190, %v185, 0
      %v195 = vsel %vm190, %v183, 0
      %197 = vmatprep.subr.bf16.mxu0 %v195
      %198 = vmatpush1.bf16.msra.mxu0 %v192
      %199 = vmatprep.subr.bf16.mxu0 0
      %200 = vmatpush1.bf16.msra.mxu0 0
      %201 = vmatprep.subr.bf16.mxu0 0
      %202 = vmatpush1.bf16.msra.mxu0 0
      %203 = vmatprep.subr.bf16.mxu0 0
      %204 = vmatpush1.bf16.msra.mxu0 0
      %205 = vmatprep.subr.bf16.mxu0 0
      %206 = vmatpush1.bf16.msra.mxu0 0
      %207 = vmatprep.subr.bf16.mxu0 0
      %208 = vmatpush1.bf16.msra.mxu0 0
      %209 = vmatprep.subr.bf16.mxu0 0
      %210 = vmatpush1.bf16.msra.mxu0 0
      %211 = vmatprep.subr.bf16.mxu0 0
      %212 = vmatpush1.bf16.msra.mxu0 0
      %213 = vmatprep.subr.bf16.mxu0 0
      %214 = vmatpush1.bf16.msra.mxu0 0
      %215 = vmatprep.subr.bf16.mxu0 0
      %216 = vmatpush1.bf16.msra.mxu0 0
      %217 = vmatprep.subr.bf16.mxu0 0
      %218 = vmatpush1.bf16.msra.mxu0 0
      %219 = vmatprep.subr.bf16.mxu0 0
      %220 = vmatpush1.bf16.msra.mxu0 0
      %221 = vmatprep.subr.bf16.mxu0 0
      %222 = vmatpush1.bf16.msra.mxu0 0
      %223 = vmatprep.subr.bf16.mxu0 0
      %224 = vmatpush1.bf16.msra.mxu0 0
      %225 = vmatprep.subr.bf16.mxu0 0
      %226 = vmatpush1.bf16.msra.mxu0 0
      %227 = vmatprep.subr.bf16.mxu0 0
      %228 = vmatpush1.bf16.msra.mxu0 0
      %229 = vmatprep.mubr.bf16.mxu0 0
      %230 = vmatmul.mubr.bf16.gmra.mrb[0].mxu0 %v188
      %v231 = vpop.f32.mrb[0].mxu0
      %v232 = vadd.f32 0.0, %v231
      %v233 = vpop.f32.mrb[0].mxu0
      %v234 = vadd.f32 0.0, %v233
      %v235 = vpop.f32.mrb[0].mxu0
      %v236 = vpop.f32.mrb[0].mxu0
      %237 = vdwg.mxu0
      %v239 = vsel %vm186, %v169, 0
      %v242 = vsel %vm190, %v178, 0
      %v245 = vsel %vm190, %v179, 0
      %247 = vmatprep.subr.bf16.mxu0 %v245
      %248 = vmatpush1.bf16.msra.mxu0 %v242
      %249 = vmatprep.subr.bf16.mxu0 0
      %250 = vmatpush1.bf16.msra.mxu0 0
      %251 = vmatprep.subr.bf16.mxu0 0
      %252 = vmatpush1.bf16.msra.mxu0 0
      %253 = vmatprep.subr.bf16.mxu0 0
      %254 = vmatpush1.bf16.msra.mxu0 0
      %255 = vmatprep.subr.bf16.mxu0 0
      %256 = vmatpush1.bf16.msra.mxu0 0
      %257 = vmatprep.subr.bf16.mxu0 0
      %258 = vmatpush1.bf16.msra.mxu0 0
      %259 = vmatprep.subr.bf16.mxu0 0
      %260 = vmatpush1.bf16.msra.mxu0 0
      %261 = vmatprep.subr.bf16.mxu0 0
      %262 = vmatpush1.bf16.msra.mxu0 0
      %263 = vmatprep.subr.bf16.mxu0 0
      %264 = vmatpush1.bf16.msra.mxu0 0
      %265 = vmatprep.subr.bf16.mxu0 0
      %266 = vmatpush1.bf16.msra.mxu0 0
      %267 = vmatprep.subr.bf16.mxu0 0
      %268 = vmatpush1.bf16.msra.mxu0 0
      %269 = vmatprep.subr.bf16.mxu0 0
      %270 = vmatpush1.bf16.msra.mxu0 0
      %271 = vmatprep.subr.bf16.mxu0 0
      %272 = vmatpush1.bf16.msra.mxu0 0
      %273 = vmatprep.subr.bf16.mxu0 0
      %274 = vmatpush1.bf16.msra.mxu0 0
      %275 = vmatprep.subr.bf16.mxu0 0
      %276 = vmatpush1.bf16.msra.mxu0 0
      %277 = vmatprep.subr.bf16.mxu0 0
      %278 = vmatpush1.bf16.msra.mxu0 0
      %279 = vmatprep.mubr.bf16.mxu0 0
      %280 = vmatmul.mubr.bf16.gmra.mrb[0].mxu0 %v239
      %v281 = vpop.f32.mrb[0].mxu0
      %v282 = vadd.f32 %v232, %v281
      %v283 = vpop.f32.mrb[0].mxu0
      %v284 = vadd.f32 %v234, %v283
      %v285 = vpop.f32.mrb[0].mxu0
      %v286 = vpop.f32.mrb[0].mxu0
      %287 = vdwg.mxu0
      %288 = vrot.lane.b32.xlu0 %v172, 112
      %v289 = vpop.permute.xlu0 %288
      %290 = vrot.lane.b32.xlu0 %v178, 126
      %v291 = vpop.permute.xlu0 %290
      %292 = vrot.lane.b32.xlu0 %v179, 126
      %v293 = vpop.permute.xlu0 %292
      %vm294 = vcmask 1031168
      %v295 = vsel %vm294, %v291, %v293
      %v297 = vsel %vm186, %v289, 0
      %v300 = vsel %vm190, %v295, 0
      %v303 = vsel %vm190, %v293, 0
      %305 = vmatprep.subr.bf16.mxu0 %v303
      %306 = vmatpush1.bf16.msra.mxu0 %v300
      %307 = vmatprep.subr.bf16.mxu0 0
      %308 = vmatpush1.bf16.msra.mxu0 0
      %309 = vmatprep.subr.bf16.mxu0 0
      %310 = vmatpush1.bf16.msra.mxu0 0
      %311 = vmatprep.subr.bf16.mxu0 0
      %312 = vmatpush1.bf16.msra.mxu0 0
      %313 = vmatprep.subr.bf16.mxu0 0
      %314 = vmatpush1.bf16.msra.mxu0 0
      %315 = vmatprep.subr.bf16.mxu0 0
      %316 = vmatpush1.bf16.msra.mxu0 0
      %317 = vmatprep.subr.bf16.mxu0 0
      %318 = vmatpush1.bf16.msra.mxu0 0
      %319 = vmatprep.subr.bf16.mxu0 0
      %320 = vmatpush1.bf16.msra.mxu0 0
      %321 = vmatprep.subr.bf16.mxu0 0
      %322 = vmatpush1.bf16.msra.mxu0 0
      %323 = vmatprep.subr.bf16.mxu0 0
      %324 = vmatpush1.bf16.msra.mxu0 0
      %325 = vmatprep.subr.bf16.mxu0 0
      %326 = vmatpush1.bf16.msra.mxu0 0
      %327 = vmatprep.subr.bf16.mxu0 0
      %328 = vmatpush1.bf16.msra.mxu0 0
      %329 = vmatprep.subr.bf16.mxu0 0
      %330 = vmatpush1.bf16.msra.mxu0 0
      %331 = vmatprep.subr.bf16.mxu0 0
      %332 = vmatpush1.bf16.msra.mxu0 0
      %333 = vmatprep.subr.bf16.mxu0 0
      %334 = vmatpush1.bf16.msra.mxu0 0
      %335 = vmatprep.subr.bf16.mxu0 0
      %336 = vmatpush1.bf16.msra.mxu0 0
      %337 = vmatprep.mubr.bf16.mxu0 0
      %338 = vmatmul.mubr.bf16.gmra.mrb[0].mxu0 %v297
      %v339 = vpop.f32.mrb[0].mxu0
      %v340 = vadd.f32 0.0, %v339
      %v341 = vpop.f32.mrb[0].mxu0
      %v342 = vadd.f32 0.0, %v341
      %v343 = vpop.f32.mrb[0].mxu0
      %v344 = vpop.f32.mrb[0].mxu0
      %345 = vdwg.mxu0
      %v346 = vadd.f32 %v282, %v340
      %v347 = vadd.f32 %v284, %v342
      %348 = vrot.lane.b32.xlu0 %v172, 104
      %v349 = vpop.permute.xlu0 %348
      %350 = vrot.lane.b32.xlu0 %v178, 112
      %v351 = vpop.permute.xlu0 %350
      %352 = vrot.lane.b32.xlu0 %v179, 112
      %v353 = vpop.permute.xlu0 %352
      %vm354 = vcmask 916480
      %v355 = vsel %vm354, %v351, %v353
      %v357 = vsel %vm186, %v349, 0
      %v360 = vsel %vm190, %v355, 0
      %v363 = vsel %vm190, %v353, 0
      %365 = vmatprep.subr.bf16.mxu0 %v363
      %366 = vmatpush1.bf16.msra.mxu0 %v360
      %367 = vmatprep.subr.bf16.mxu0 0
      %368 = vmatpush1.bf16.msra.mxu0 0
      %369 = vmatprep.subr.bf16.mxu0 0
      %370 = vmatpush1.bf16.msra.mxu0 0
      %371 = vmatprep.subr.bf16.mxu0 0
      %372 = vmatpush1.bf16.msra.mxu0 0
      %373 = vmatprep.subr.bf16.mxu0 0
      %374 = vmatpush1.bf16.msra.mxu0 0
      %375 = vmatprep.subr.bf16.mxu0 0
      %376 = vmatpush1.bf16.msra.mxu0 0
      %377 = vmatprep.subr.bf16.mxu0 0
      %378 = vmatpush1.bf16.msra.mxu0 0
      %379 = vmatprep.subr.bf16.mxu0 0
      %380 = vmatpush1.bf16.msra.mxu0 0
      %381 = vmatprep.subr.bf16.mxu0 0
      %382 = vmatpush1.bf16.msra.mxu0 0
      %383 = vmatprep.subr.bf16.mxu0 0
      %384 = vmatpush1.bf16.msra.mxu0 0
      %385 = vmatprep.subr.bf16.mxu0 0
      %386 = vmatpush1.bf16.msra.mxu0 0
      %387 = vmatprep.subr.bf16.mxu0 0
      %388 = vmatpush1.bf16.msra.mxu0 0
      %389 = vmatprep.subr.bf16.mxu0 0
      %390 = vmatpush1.bf16.msra.mxu0 0
      %391 = vmatprep.subr.bf16.mxu0 0
      %392 = vmatpush1.bf16.msra.mxu0 0
      %393 = vmatprep.subr.bf16.mxu0 0
      %394 = vmatpush1.bf16.msra.mxu0 0
      %395 = vmatprep.subr.bf16.mxu0 0
      %396 = vmatpush1.bf16.msra.mxu0 0
      %397 = vmatprep.mubr.bf16.mxu0 0
      %398 = vmatmul.mubr.bf16.gmra.mrb[0].mxu0 %v357
      %v399 = vpop.f32.mrb[0].mxu0
      %v400 = vadd.f32 0.0, %v399
      %v401 = vpop.f32.mrb[0].mxu0
      %v402 = vadd.f32 0.0, %v401
      %v403 = vpop.f32.mrb[0].mxu0
      %v404 = vpop.f32.mrb[0].mxu0
      %405 = vdwg.mxu0
      %v406 = vadd.f32 %v346, %v400
      %v407 = vadd.f32 %v347, %v402
      %408 = vrot.lane.b32.xlu0 %v172, 96
      %v409 = vpop.permute.xlu0 %408
      %410 = vrot.lane.b32.xlu0 %v178, 111
      %v411 = vpop.permute.xlu0 %410
      %412 = vrot.lane.b32.xlu0 %v179, 111
      %v413 = vpop.permute.xlu0 %412
      %vm414 = vcmask 908288
      %v415 = vsel %vm414, %v411, %v413
      %v417 = vsel %vm186, %v409, 0
      %v420 = vsel %vm190, %v415, 0
      %v423 = vsel %vm190, %v413, 0
      %425 = vmatprep.subr.bf16.mxu0 %v423
      %426 = vmatpush1.bf16.msra.mxu0 %v420
      %427 = vmatprep.subr.bf16.mxu0 0
      %428 = vmatpush1.bf16.msra.mxu0 0
      %429 = vmatprep.subr.bf16.mxu0 0
      %430 = vmatpush1.bf16.msra.mxu0 0
      %431 = vmatprep.subr.bf16.mxu0 0
      %432 = vmatpush1.bf16.msra.mxu0 0
      %433 = vmatprep.subr.bf16.mxu0 0
      %434 = vmatpush1.bf16.msra.mxu0 0
      %435 = vmatprep.subr.bf16.mxu0 0
      %436 = vmatpush1.bf16.msra.mxu0 0
      %437 = vmatprep.subr.bf16.mxu0 0
      %438 = vmatpush1.bf16.msra.mxu0 0
      %439 = vmatprep.subr.bf16.mxu0 0
      %440 = vmatpush1.bf16.msra.mxu0 0
      %441 = vmatprep.subr.bf16.mxu0 0
      %442 = vmatpush1.bf16.msra.mxu0 0
      %443 = vmatprep.subr.bf16.mxu0 0
      %444 = vmatpush1.bf16.msra.mxu0 0
      %445 = vmatprep.subr.bf16.mxu0 0
      %446 = vmatpush1.bf16.msra.mxu0 0
      %447 = vmatprep.subr.bf16.mxu0 0
      %448 = vmatpush1.bf16.msra.mxu0 0
      %449 = vmatprep.subr.bf16.mxu0 0
      %450 = vmatpush1.bf16.msra.mxu0 0
      %451 = vmatprep.subr.bf16.mxu0 0
      %452 = vmatpush1.bf16.msra.mxu0 0
      %453 = vmatprep.subr.bf16.mxu0 0
      %454 = vmatpush1.bf16.msra.mxu0 0
      %455 = vmatprep.subr.bf16.mxu0 0
      %456 = vmatpush1.bf16.msra.mxu0 0
      %457 = vmatprep.mubr.bf16.mxu0 0
      %458 = vmatmul.mubr.bf16.gmra.mrb[0].mxu0 %v417
      %v459 = vpop.f32.mrb[0].mxu0
      %v460 = vadd.f32 0.0, %v459
      %v461 = vpop.f32.mrb[0].mxu0
      %v462 = vadd.f32 0.0, %v461
      %v463 = vpop.f32.mrb[0].mxu0
      %v464 = vpop.f32.mrb[0].mxu0
      %465 = vdwg.mxu0
      %v466 = vadd.f32 %v406, %v460
      %v467 = vadd.f32 %v407, %v462
      %468 = vrot.lane.b32.xlu0 %v172, 88
      %v469 = vpop.permute.xlu0 %468
      %470 = vrot.lane.b32.xlu0 %v178, 110
      %v471 = vpop.permute.xlu0 %470
      %472 = vrot.lane.b32.xlu0 %v179, 110
      %v473 = vpop.permute.xlu0 %472
      %vm474 = vcmask 900096
      %v475 = vsel %vm474, %v471, %v473
      %v477 = vsel %vm186, %v469, 0
      %v480 = vsel %vm190, %v475, 0
      %v483 = vsel %vm190, %v473, 0
      %485 = vmatprep.subr.bf16.mxu0 %v483
      %486 = vmatpush1.bf16.msra.mxu0 %v480
      %487 = vmatprep.subr.bf16.mxu0 0
      %488 = vmatpush1.bf16.msra.mxu0 0
      %489 = vmatprep.subr.bf16.mxu0 0
      %490 = vmatpush1.bf16.msra.mxu0 0
      %491 = vmatprep.subr.bf16.mxu0 0
      %492 = vmatpush1.bf16.msra.mxu0 0
      %493 = vmatprep.subr.bf16.mxu0 0
      %494 = vmatpush1.bf16.msra.mxu0 0
      %495 = vmatprep.subr.bf16.mxu0 0
      %496 = vmatpush1.bf16.msra.mxu0 0
      %497 = vmatprep.subr.bf16.mxu0 0
      %498 = vmatpush1.bf16.msra.mxu0 0
      %499 = vmatprep.subr.bf16.mxu0 0
      %500 = vmatpush1.bf16.msra.mxu0 0
      %501 = vmatprep.subr.bf16.mxu0 0
      %502 = vmatpush1.bf16.msra.mxu0 0
      %503 = vmatprep.subr.bf16.mxu0 0
      %504 = vmatpush1.bf16.msra.mxu0 0
      %505 = vmatprep.subr.bf16.mxu0 0
      %506 = vmatpush1.bf16.msra.mxu0 0
      %507 = vmatprep.subr.bf16.mxu0 0
      %508 = vmatpush1.bf16.msra.mxu0 0
      %509 = vmatprep.subr.bf16.mxu0 0
      %510 = vmatpush1.bf16.msra.mxu0 0
      %511 = vmatprep.subr.bf16.mxu0 0
      %512 = vmatpush1.bf16.msra.mxu0 0
      %513 = vmatprep.subr.bf16.mxu0 0
      %514 = vmatpush1.bf16.msra.mxu0 0
      %515 = vmatprep.subr.bf16.mxu0 0
      %516 = vmatpush1.bf16.msra.mxu0 0
      %517 = vmatprep.mubr.bf16.mxu0 0
      %518 = vmatmul.mubr.bf16.gmra.mrb[0].mxu0 %v477
      %v519 = vpop.f32.mrb[0].mxu0
      %v520 = vadd.f32 0.0, %v519
      %v521 = vpop.f32.mrb[0].mxu0
      %v522 = vadd.f32 0.0, %v521
      %v523 = vpop.f32.mrb[0].mxu0
      %v524 = vpop.f32.mrb[0].mxu0
      %525 = vdwg.mxu0
      %v526 = vadd.f32 %v466, %v520
      %v527 = vadd.f32 %v467, %v522
      %528 = vrot.lane.b32.xlu0 %v172, 80
      %v529 = vpop.permute.xlu0 %528
      %530 = vrot.lane.b32.xlu0 %v178, 96
      %v531 = vpop.permute.xlu0 %530
      %532 = vrot.lane.b32.xlu0 %v179, 96
      %v533 = vpop.permute.xlu0 %532
      %vm534 = vcmask 785408
      %v535 = vsel %vm534, %v531, %v533
      %v537 = vsel %vm186, %v529, 0
      %v540 = vsel %vm190, %v535, 0
      %v543 = vsel %vm190, %v533, 0
      %545 = vmatprep.subr.bf16.mxu0 %v543
      %546 = vmatpush1.bf16.msra.mxu0 %v540
      %547 = vmatprep.subr.bf16.mxu0 0
      %548 = vmatpush1.bf16.msra.mxu0 0
      %549 = vmatprep.subr.bf16.mxu0 0
      %550 = vmatpush1.bf16.msra.mxu0 0
      %551 = vmatprep.subr.bf16.mxu0 0
      %552 = vmatpush1.bf16.msra.mxu0 0
      %553 = vmatprep.subr.bf16.mxu0 0
      %554 = vmatpush1.bf16.msra.mxu0 0
      %555 = vmatprep.subr.bf16.mxu0 0
      %556 = vmatpush1.bf16.msra.mxu0 0
      %557 = vmatprep.subr.bf16.mxu0 0
      %558 = vmatpush1.bf16.msra.mxu0 0
      %559 = vmatprep.subr.bf16.mxu0 0
      %560 = vmatpush1.bf16.msra.mxu0 0
      %561 = vmatprep.subr.bf16.mxu0 0
      %562 = vmatpush1.bf16.msra.mxu0 0
      %563 = vmatprep.subr.bf16.mxu0 0
      %564 = vmatpush1.bf16.msra.mxu0 0
      %565 = vmatprep.subr.bf16.mxu0 0
      %566 = vmatpush1.bf16.msra.mxu0 0
      %567 = vmatprep.subr.bf16.mxu0 0
      %568 = vmatpush1.bf16.msra.mxu0 0
      %569 = vmatprep.subr.bf16.mxu0 0
      %570 = vmatpush1.bf16.msra.mxu0 0
      %571 = vmatprep.subr.bf16.mxu0 0
      %572 = vmatpush1.bf16.msra.mxu0 0
      %573 = vmatprep.subr.bf16.mxu0 0
      %574 = vmatpush1.bf16.msra.mxu0 0
      %575 = vmatprep.subr.bf16.mxu0 0
      %576 = vmatpush1.bf16.msra.mxu0 0
      %577 = vmatprep.mubr.bf16.mxu0 0
      %578 = vmatmul.mubr.bf16.gmra.mrb[0].mxu0 %v537
      %v579 = vpop.f32.mrb[0].mxu0
      %v580 = vadd.f32 0.0, %v579
      %v581 = vpop.f32.mrb[0].mxu0
      %v582 = vadd.f32 0.0, %v581
      %v583 = vpop.f32.mrb[0].mxu0
      %v584 = vpop.f32.mrb[0].mxu0
      %585 = vdwg.mxu0
      %v586 = vadd.f32 %v526, %v580
      %v587 = vadd.f32 %v527, %v582
      %v588 = vld [vmem:[%s156] sm:$0xff]
      %v589 = vld [vmem:[%s156 + $0x8] sm:$0xf]
      %590 = vrot.lane.b32.xlu0 %v172, 72
      %v591 = vpop.permute.xlu0 %590
      %v594 = vunpack.c.l.b16 %v588
      %v595 = vunpack.c.h.b16 %v588
      %v596 = vunpack.c.l.b16 %v589
      %v597 = vpack.c.b16 %v594, %v594
      %v598 = vpack.c.b16 %v595, %v595
      %v599 = vpack.c.b16 %v596, %v596
      %600 = vrot.lane.b32.xlu0 %v597, 95
      %v601 = vpop.permute.xlu0 %600
      %602 = vrot.lane.b32.xlu0 %v598, 95
      %v603 = vpop.permute.xlu0 %602
      %604 = vrot.lane.b32.xlu0 %v599, 95
      %v605 = vpop.permute.xlu0 %604
      %vm606 = vcmask 777216
      %v607 = vsel %vm606, %v601, %v603
      %v608 = vsel %vm606, %v603, %v605
      %v610 = vsel %vm186, %v591, 0
      %v613 = vsel %vm190, %v607, 0
      %v616 = vsel %vm190, %v608, 0
      %618 = vmatprep.subr.bf16.mxu0 %v616
      %619 = vmatpush1.bf16.msra.mxu0 %v613
      %620 = vmatprep.subr.bf16.mxu0 0
      %621 = vmatpush1.bf16.msra.mxu0 0
      %622 = vmatprep.subr.bf16.mxu0 0
      %623 = vmatpush1.bf16.msra.mxu0 0
      %624 = vmatprep.subr.bf16.mxu0 0
      %625 = vmatpush1.bf16.msra.mxu0 0
      %626 = vmatprep.subr.bf16.mxu0 0
      %627 = vmatpush1.bf16.msra.mxu0 0
      %628 = vmatprep.subr.bf16.mxu0 0
      %629 = vmatpush1.bf16.msra.mxu0 0
      %630 = vmatprep.subr.bf16.mxu0 0
      %631 = vmatpush1.bf16.msra.mxu0 0
      %632 = vmatprep.subr.bf16.mxu0 0
      %633 = vmatpush1.bf16.msra.mxu0 0
      %634 = vmatprep.subr.bf16.mxu0 0
      %635 = vmatpush1.bf16.msra.mxu0 0
      %636 = vmatprep.subr.bf16.mxu0 0
      %637 = vmatpush1.bf16.msra.mxu0 0
      %638 = vmatprep.subr.bf16.mxu0 0
      %639 = vmatpush1.bf16.msra.mxu0 0
      %640 = vmatprep.subr.bf16.mxu0 0
      %641 = vmatpush1.bf16.msra.mxu0 0
      %642 = vmatprep.subr.bf16.mxu0 0
      %643 = vmatpush1.bf16.msra.mxu0 0
      %644 = vmatprep.subr.bf16.mxu0 0
      %645 = vmatpush1.bf16.msra.mxu0 0
      %646 = vmatprep.subr.bf16.mxu0 0
      %647 = vmatpush1.bf16.msra.mxu0 0
      %648 = vmatprep.subr.bf16.mxu0 0
      %649 = vmatpush1.bf16.msra.mxu0 0
      %650 = vmatprep.mubr.bf16.mxu0 0
      %651 = vmatmul.mubr.bf16.gmra.mrb[0].mxu0 %v610
      %v652 = vpop.f32.mrb[0].mxu0
      %v653 = vadd.f32 0.0, %v652
      %v654 = vpop.f32.mrb[0].mxu0
      %v655 = vadd.f32 0.0, %v654
      %v656 = vpop.f32.mrb[0].mxu0
      %v657 = vpop.f32.mrb[0].mxu0
      %658 = vdwg.mxu0
      %v659 = vadd.f32 %v586, %v653
      %v660 = vadd.f32 %v587, %v655
      %661 = vrot.lane.b32.xlu0 %v172, 64
      %v662 = vpop.permute.xlu0 %661
      %663 = vrot.lane.b32.xlu0 %v597, 94
      %v664 = vpop.permute.xlu0 %663
      %665 = vrot.lane.b32.xlu0 %v598, 94
      %v666 = vpop.permute.xlu0 %665
      %667 = vrot.lane.b32.xlu0 %v599, 94
      %v668 = vpop.permute.xlu0 %667
      %vm669 = vcmask 769024
      %v670 = vsel %vm669, %v664, %v666
      %v671 = vsel %vm669, %v666, %v668
      %v673 = vsel %vm186, %v662, 0
      %v676 = vsel %vm190, %v670, 0
      %v679 = vsel %vm190, %v671, 0
      %681 = vmatprep.subr.bf16.mxu0 %v679
      %682 = vmatpush1.bf16.msra.mxu0 %v676
      %683 = vmatprep.subr.bf16.mxu0 0
      %684 = vmatpush1.bf16.msra.mxu0 0
      %685 = vmatprep.subr.bf16.mxu0 0
      %686 = vmatpush1.bf16.msra.mxu0 0
      %687 = vmatprep.subr.bf16.mxu0 0
      %688 = vmatpush1.bf16.msra.mxu0 0
      %689 = vmatprep.subr.bf16.mxu0 0
      %690 = vmatpush1.bf16.msra.mxu0 0
      %691 = vmatprep.subr.bf16.mxu0 0
      %692 = vmatpush1.bf16.msra.mxu0 0
      %693 = vmatprep.subr.bf16.mxu0 0
      %694 = vmatpush1.bf16.msra.mxu0 0
      %695 = vmatprep.subr.bf16.mxu0 0
      %696 = vmatpush1.bf16.msra.mxu0 0
      %697 = vmatprep.subr.bf16.mxu0 0
      %698 = vmatpush1.bf16.msra.mxu0 0
      %699 = vmatprep.subr.bf16.mxu0 0
      %700 = vmatpush1.bf16.msra.mxu0 0
      %701 = vmatprep.subr.bf16.mxu0 0
      %702 = vmatpush1.bf16.msra.mxu0 0
      %703 = vmatprep.subr.bf16.mxu0 0
      %704 = vmatpush1.bf16.msra.mxu0 0
      %705 = vmatprep.subr.bf16.mxu0 0
      %706 = vmatpush1.bf16.msra.mxu0 0
      %707 = vmatprep.subr.bf16.mxu0 0
      %708 = vmatpush1.bf16.msra.mxu0 0
      %709 = vmatprep.subr.bf16.mxu0 0
      %710 = vmatpush1.bf16.msra.mxu0 0
      %711 = vmatprep.subr.bf16.mxu0 0
      %712 = vmatpush1.bf16.msra.mxu0 0
      %713 = vmatprep.mubr.bf16.mxu0 0
      %714 = vmatmul.mubr.bf16.gmra.mrb[0].mxu0 %v673
      %v715 = vpop.f32.mrb[0].mxu0
      %v716 = vadd.f32 0.0, %v715
      %v717 = vpop.f32.mrb[0].mxu0
      %v718 = vadd.f32 0.0, %v717
      %v719 = vpop.f32.mrb[0].mxu0
      %v720 = vpop.f32.mrb[0].mxu0
      %721 = vdwg.mxu0
      %v722 = vadd.f32 %v659, %v716
      %v723 = vadd.f32 %v660, %v718
      %724 = vst [vmem:[%s165] sm:$0xff] %v722
      %vm725 = vcmask 785408
      %726 = vst.msk [vmem:[%s165 + $0x8] sm:$0xff] %vm725, %v723
      %s727 = smul.u32 2, %s18
      %p728 = scmp.lt.s32.totalorder %s17, 1
      %s729 = scalar_select %p728, %s17, 1
      %p730 = scmp.lt.s32.totalorder %s727, 1
      %s731 = scalar_select %p730, %s727, 1
      %s732 = smul.addr %s729, 2
      %s733 = sadd.s32 %s731, %s732
      %s734 = smul.addr %s733, 8
      %s735 = scalar_lea.vmem %s2, %s734
      // Predicated region
      $region29: #{frequency_log_gabor_conv2d.3} parent=27 // pred_check
        %p736 = pneg %p92
      $region30: #{frequency_log_gabor_conv2d.3} parent=27 // pred_check_branch
        %738 = sbr.rel (%p736) target = $region32
      $region31: #{frequency_log_gabor_conv2d.3} parent=27 // pred_region
        %s739 = smul.u32 2, %s18
      $region32: #{frequency_log_gabor_conv2d.3} parent=27 // pred_fallthru
        _
    $region28: #{frequency_log_gabor_conv2d.3} parent=5 // pred_fallthru
      _
    %p740 = scmp.le.s32.totalorder 2, %s8
    // Predicated region
    $region33: #{frequency_log_gabor_conv2d.3} parent=5 // pred_check
      %p741 = pneg %p740
    $region34: #{frequency_log_gabor_conv2d.3} parent=5 // pred_check_branch
      %743 = sbr.rel (%p741) target = $region36
    $region35: #{frequency_log_gabor_conv2d.3} parent=5 // pred_region
      %s744 = ssub.s32 %s8, 2
      // Predicated region
      $region37: #{frequency_log_gabor_conv2d.3} parent=35 // pred_check
        %p745 = pneg %p98
      $region38: #{frequency_log_gabor_conv2d.3} parent=35 // pred_check_branch
        %747 = sbr.rel (%p745) target = $region40
      $region39: #{frequency_log_gabor_conv2d.3} parent=35 // pred_region
        %s748 = smul.u32 2, %s20
        %p749 = scmp.lt.s32.totalorder %s19, 1
        %s750 = scalar_select %p749, %s19, 1
        %p751 = scmp.lt.s32.totalorder %s748, 1
        %s752 = scalar_select %p751, %s748, 1
        %s753 = smul.addr %s750, 2
        %s754 = sadd.s32 %s752, %s753
        %s755 = smul.addr %s754, 8
        %s756 = scalar_lea.vmem %s2, %s755
      $region40: #{frequency_log_gabor_conv2d.3} parent=35 // pred_fallthru
        _
    $region36: #{frequency_log_gabor_conv2d.3} parent=5 // pred_fallthru
      _
  $region6: #{frequency_log_gabor_conv2d.3} parent=0 // loop_footer
    %s12 = sadd.s32 1, %s8
  $region7: #{frequency_log_gabor_conv2d.3} parent=0 // loop_footer_branch
    %7 = sbr.rel target = $region3
  $region8: #{frequency_log_gabor_conv2d.3} parent=0 // loop_exit
    _

</llo_original>
